<compile_context>
chip_gen: v6e
topology: v6e:2x2x1
jax: 0.10.0
libtpu: 0.0.40
codegen_flags: <defaults>
</compile_context>

<pallas_src>
import jax
import jax.numpy as jnp
from jax.experimental import pallas as pl
from jax.experimental.pallas import tpu as pltpu

# Model dims (from the PyTorch module: Linear(3,10) -> Linear(10,8) -> Linear(8,2)).
N_FEATURE = 3
H1 = 10
H2 = 8
N_OUTPUT = 2

LANES = 128        # TPU lane width
N_OUT_PAD = 8      # padded logit width stored to HBM (real logits = first 2 lanes)

# Row layout of the packed parameter slab [P_ROWS, 128] (weights stored [in, out]):
W2_OFF = 0         # rows   0..127 : w2 zero-padded to [128,128] (rows 0..9, cols 0..7 live)
W3_OFF = 128       # rows 128..255 : w3 zero-padded to [128,128] (rows 0..7, cols 0..1 live)
W1_OFF = 256       # rows 256..258 : w1 (3 rows, cols 0..9 live)
B1_ROW = 259       # row 259       : b1 (cols 0..9)
B2_ROW = 260       # row 260       : b2 (cols 0..7)
B3_ROW = 261       # row 261       : b3 (cols 0..1)
P_ROWS = 264       # padded to a multiple of 8 sublanes


def _round_up(n, m):
    return ((n + m - 1) // m) * m


def mlp_kernel(x_ref, p_ref, o_ref):
    """One batch tile: x[TM, 3] + packed params -> out[TM, 8] (lanes>=2 are zero)."""
    x = x_ref[...]                                        # [TM, 3] f32

    # ---- Layer 1 (K=3) on the VPU: hoisted lane-broadcasts, tree-added ----
    # Padded lanes (>=10) stay exactly 0 because the slab is zero-padded.
    t0 = x[:, 0:1] * p_ref[W1_OFF + 0:W1_OFF + 1, :]
    t1 = x[:, 1:2] * p_ref[W1_OFF + 1:W1_OFF + 2, :]
    t2 = x[:, 2:3] * p_ref[W1_OFF + 2:W1_OFF + 3, :]
    b1 = p_ref[B1_ROW:B1_ROW + 1, :]
    h1 = jnp.maximum((t0 + t1) + (t2 + b1), 0.0)          # [TM, 128]

    # ---- Layer 2 on the MXU (padded 128x128 dot is exact) ----
    w2 = p_ref[W2_OFF:W2_OFF + LANES, :]                  # [128, 128]
    b2 = p_ref[B2_ROW:B2_ROW + 1, :]
    h2 = jnp.dot(h1, w2, preferred_element_type=jnp.float32,
                 precision=jax.lax.Precision.HIGHEST)
    h2 = jnp.maximum(h2 + b2, 0.0)                        # [TM, 128], lanes>=8 zero

    # ---- Layer 3 on the MXU, then narrow to the 8-lane output block ----
    w3 = p_ref[W3_OFF:W3_OFF + LANES, :]                  # [128, 128], cols>=2 zero
    b3 = p_ref[B3_ROW:B3_ROW + 1, :N_OUT_PAD]             # [1, 8]
    out = jnp.dot(h2, w3, preferred_element_type=jnp.float32,
                  precision=jax.lax.Precision.HIGHEST)    # [TM, 128], lanes>=2 zero
    o_ref[...] = (out[:, :N_OUT_PAD] + b3).astype(o_ref.dtype)   # [TM, 8]


def pack_params(params):
    """Pack all six tiny weight/bias tensors into one zero-padded [264,128] slab."""
    w1, b1, w2, b2, w3, b3 = params
    p = jnp.zeros((P_ROWS, LANES), jnp.float32)
    p = p.at[W2_OFF:W2_OFF + w2.shape[0], :w2.shape[1]].set(w2)   # MXU tile for layer 2
    p = p.at[W3_OFF:W3_OFF + w3.shape[0], :w3.shape[1]].set(w3)   # MXU tile for layer 3
    p = p.at[W1_OFF:W1_OFF + w1.shape[0], :w1.shape[1]].set(w1)
    p = p.at[B1_ROW, :b1.size].set(b1.reshape(-1))
    p = p.at[B2_ROW, :b2.size].set(b2.reshape(-1))
    p = p.at[B3_ROW, :b3.size].set(b3.reshape(-1))
    return p


def net_forward(x, params, *, block_m=2048):
    """Forward pass of Net.  x: [N, 3] f32, params: transposed ([in,out]) tensors."""
    n = x.shape[0]
    n_output = params[4].shape[1]
    p = pack_params(params)

    # Batch tile: capped at block_m rows, 8-sublane aligned, and chosen so the
    # grid has at least 2 tiles whenever n > 8 (shards across v7x's 2 TCs via
    # dimension_semantics=("parallel",); neutral on single-TC v5e/v6e).
    tm = min(block_m, max(8, _round_up(pl.cdiv(n, 2), 8)))
    n_pad = _round_up(n, tm)
    if n_pad != n:
        x = jnp.pad(x, ((0, n_pad - n), (0, 0)))

    grid = (n_pad // tm,)
    # Padded-contraction FLOPs (layer 1 on VPU at 128 lanes, layers 2/3 on MXU).
    flops = 2 * n_pad * (N_FEATURE * LANES + LANES * LANES + LANES * LANES)
    bytes_accessed = (n_pad * N_FEATURE * 4) + (P_ROWS * LANES * 4) + (n_pad * N_OUT_PAD * 4)

    out_padded = pl.pallas_call(
        mlp_kernel,
        out_shape=jax.ShapeDtypeStruct((n_pad, N_OUT_PAD), jnp.float32),
        grid=grid,
        in_specs=[
            pl.BlockSpec((tm, N_FEATURE), lambda i: (i, 0)),   # batch tile of x
            pl.BlockSpec((P_ROWS, LANES), lambda i: (0, 0)),   # params stay resident
        ],
        out_specs=pl.BlockSpec((tm, N_OUT_PAD), lambda i: (i, 0)),  # narrow output block
        compiler_params=pltpu.CompilerParams(
            dimension_semantics=("parallel",),
            vmem_limit_bytes=32 * 1024 * 1024,
        ),
        cost_estimate=pl.CostEstimate(
            flops=flops, transcendentals=0, bytes_accessed=bytes_accessed),
    )(x, p)
    return out_padded[:n, :n_output]


def init_params(key, n_feature, n_output):
    # Synthetic normal(0, 0.1) init matching torch.nn.Linear shapes
    # (hidden1: (10, n_feature), hidden2: (8, 10), out: (n_output, 8)),
    # stored transposed ([in, out]) for the kernel.  Not kaiming-uniform.
    k1, k2, k3, k4, k5, k6 = jax.random.split(key, 6)
    w1 = jax.random.normal(k1, (n_feature, H1), jnp.float32) * 0.1
    b1 = jax.random.normal(k2, (1, H1), jnp.float32) * 0.1
    w2 = jax.random.normal(k3, (H1, H2), jnp.float32) * 0.1
    b2 = jax.random.normal(k4, (1, H2), jnp.float32) * 0.1
    w3 = jax.random.normal(k5, (H2, n_output), jnp.float32) * 0.1
    b3 = jax.random.normal(k6, (1, n_output), jnp.float32) * 0.1
    return (w1, b1, w2, b2, w3, b3)


def reference_forward(x, params):
    (w1, b1, w2, b2, w3, b3) = params
    hi = jax.lax.Precision.HIGHEST
    h1 = jnp.maximum(jnp.dot(x, w1, precision=hi) + b1, 0.0)
    h2 = jnp.maximum(jnp.dot(h1, w2, precision=hi) + b2, 0.0)
    return jnp.dot(h2, w3, precision=hi) + b3


if __name__ == "__main__":
    key = jax.random.PRNGKey(0)
    kx, kp = jax.random.split(key)

    n_feature, n_output = N_FEATURE, N_OUTPUT
    batch = 16  # small batch consistent with the 2-class classification setup

    # Mimic the script's data: half centered at +2, half at -2.
    x_pos = 2.0 + jax.random.normal(kx, (batch // 2, n_feature), jnp.float32)
    x_neg = -2.0 + jax.random.normal(jax.random.fold_in(kx, 1),
                                     (batch // 2, n_feature), jnp.float32)
    x = jnp.concatenate([x_pos, x_neg], axis=0)

    params = init_params(kp, n_feature, n_output)

    out = net_forward(x, params)
    out = jax.block_until_ready(out)

    ref = reference_forward(x, params)
    assert out.shape == (batch, n_output)
    assert jnp.allclose(out, ref, atol=1e-5, rtol=1e-5), "mismatch vs JAX reference"

    print("KERNEL_OK")
</pallas_src>

<mosaic_0001>
module attributes {stable_mosaic.version = 11 : i64} {
  func.func @mlp_kernel(%arg0: i32, %arg1: memref<8x3xf32, #tpu.memory_space<vmem>>, %arg2: memref<264x128xf32, #tpu.memory_space<vmem>>, %arg3: memref<8x8xf32, #tpu.memory_space<vmem>>) attributes {dimension_semantics = [#tpu.dimension_semantics<parallel>], iteration_bounds = array<i64: 2>, scalar_prefetch = 0 : i64, scratch_operands = 0 : i64, tpu.core_type = #tpu.core_type<tc>, window_params = [{transform_indices = @transform_0, window_bounds = array<i64: 8, 3>}, {pipeline_mode = #tpu.pipeline_mode<synchronous>, transform_indices = @transform_1, window_bounds = array<i64: 264, 128>}, {transform_indices = @transform_2, window_bounds = array<i64: 8, 8>}]} {
    %c0 = arith.constant 0 : index
    %c0_0 = arith.constant 0 : index
    %0 = vector.load %arg1[%c0, %c0_0] : memref<8x3xf32, #tpu.memory_space<vmem>>, vector<8x3xf32>
    %1 = vector.extract_strided_slice %0 {offsets = [0, 0], sizes = [8, 1], strides = [1, 1]} : vector<8x3xf32> to vector<8x1xf32>
    %c256 = arith.constant 256 : index
    %c0_1 = arith.constant 0 : index
    %2 = vector.load %arg2[%c256, %c0_1] : memref<264x128xf32, #tpu.memory_space<vmem>>, vector<1x128xf32>
    %3 = vector.broadcast %1 : vector<8x1xf32> to vector<8x128xf32>
    %4 = vector.broadcast %2 : vector<1x128xf32> to vector<8x128xf32>
    %5 = arith.mulf %3, %4 : vector<8x128xf32>
    %6 = vector.extract_strided_slice %0 {offsets = [0, 1], sizes = [8, 1], strides = [1, 1]} : vector<8x3xf32> to vector<8x1xf32>
    %c257 = arith.constant 257 : index
    %c0_2 = arith.constant 0 : index
    %7 = vector.load %arg2[%c257, %c0_2] : memref<264x128xf32, #tpu.memory_space<vmem>>, vector<1x128xf32>
    %8 = vector.broadcast %6 : vector<8x1xf32> to vector<8x128xf32>
    %9 = vector.broadcast %7 : vector<1x128xf32> to vector<8x128xf32>
    %10 = arith.mulf %8, %9 : vector<8x128xf32>
    %11 = vector.extract_strided_slice %0 {offsets = [0, 2], sizes = [8, 1], strides = [1, 1]} : vector<8x3xf32> to vector<8x1xf32>
    %c258 = arith.constant 258 : index
    %c0_3 = arith.constant 0 : index
    %12 = vector.load %arg2[%c258, %c0_3] : memref<264x128xf32, #tpu.memory_space<vmem>>, vector<1x128xf32>
    %13 = vector.broadcast %11 : vector<8x1xf32> to vector<8x128xf32>
    %14 = vector.broadcast %12 : vector<1x128xf32> to vector<8x128xf32>
    %15 = arith.mulf %13, %14 : vector<8x128xf32>
    %c259 = arith.constant 259 : index
    %c0_4 = arith.constant 0 : index
    %16 = vector.load %arg2[%c259, %c0_4] : memref<264x128xf32, #tpu.memory_space<vmem>>, vector<1x128xf32>
    %17 = arith.addf %5, %10 : vector<8x128xf32>
    %18 = vector.broadcast %16 : vector<1x128xf32> to vector<8x128xf32>
    %19 = arith.addf %15, %18 : vector<8x128xf32>
    %20 = arith.addf %17, %19 : vector<8x128xf32>
    %cst = arith.constant 0.000000e+00 : f32
    %21 = vector.broadcast %cst : f32 to vector<8x128xf32>
    %22 = arith.maximumf %20, %21 : vector<8x128xf32>
    %c0_5 = arith.constant 0 : index
    %c0_6 = arith.constant 0 : index
    %23 = vector.load %arg2[%c0_5, %c0_6] : memref<264x128xf32, #tpu.memory_space<vmem>>, vector<128x128xf32>
    %c260 = arith.constant 260 : index
    %c0_7 = arith.constant 0 : index
    %24 = vector.load %arg2[%c260, %c0_7] : memref<264x128xf32, #tpu.memory_space<vmem>>, vector<1x128xf32>
    %cst_8 = arith.constant dense<0.000000e+00> : vector<8x128xf32>
    %25 = tpu.matmul %22, %23, %cst_8 {dimension_numbers = #tpu.dot_dimension_numbers<[1], [0], [0], [1], [0, 0, 1, 1], [], []>, precision = #tpu.contract_precision<fp32>} : vector<8x128xf32>, vector<128x128xf32>, vector<8x128xf32> -> vector<8x128xf32>
    %26 = vector.broadcast %24 : vector<1x128xf32> to vector<8x128xf32>
    %27 = arith.addf %25, %26 : vector<8x128xf32>
    %cst_9 = arith.constant 0.000000e+00 : f32
    %28 = vector.broadcast %cst_9 : f32 to vector<8x128xf32>
    %29 = arith.maximumf %27, %28 : vector<8x128xf32>
    %c128 = arith.constant 128 : index
    %c0_10 = arith.constant 0 : index
    %30 = vector.load %arg2[%c128, %c0_10] : memref<264x128xf32, #tpu.memory_space<vmem>>, vector<128x128xf32>
    %c261 = arith.constant 261 : index
    %c0_11 = arith.constant 0 : index
    %31 = vector.load %arg2[%c261, %c0_11] : memref<264x128xf32, #tpu.memory_space<vmem>>, vector<1x8xf32>
    %cst_12 = arith.constant dense<0.000000e+00> : vector<8x128xf32>
    %32 = tpu.matmul %29, %30, %cst_12 {dimension_numbers = #tpu.dot_dimension_numbers<[1], [0], [0], [1], [0, 0, 1, 1], [], []>, precision = #tpu.contract_precision<fp32>} : vector<8x128xf32>, vector<128x128xf32>, vector<8x128xf32> -> vector<8x128xf32>
    %33 = vector.extract_strided_slice %32 {offsets = [0, 0], sizes = [8, 8], strides = [1, 1]} : vector<8x128xf32> to vector<8x8xf32>
    %34 = vector.broadcast %31 : vector<1x8xf32> to vector<8x8xf32>
    %35 = arith.addf %33, %34 : vector<8x8xf32>
    %c0_13 = arith.constant 0 : index
    %c0_14 = arith.constant 0 : index
    %36 = vector.load %arg3[%c0_13, %c0_14] : memref<8x8xf32, #tpu.memory_space<vmem>>, vector<8x8xf32>
    tpu.vector_store %arg3[%c0_13, %c0_14], %35 {strides = array<i32>} : memref<8x8xf32, #tpu.memory_space<vmem>>, vector<8x8xf32>,
    return
  }
  func.func @transform_0(%arg0: i32) -> (i32, i32) {
    %c0_i32 = arith.constant 0 : i32
    %c0_i32_0 = arith.constant 0 : i32
    return %arg0, %c0_i32 : i32, i32
  }
  func.func @transform_1(%arg0: i32) -> (i32, i32) {
    %c0_i32 = arith.constant 0 : i32
    %c0_i32_0 = arith.constant 0 : i32
    %c0_i32_1 = arith.constant 0 : i32
    return %c0_i32, %c0_i32_0 : i32, i32
  }
  func.func @transform_2(%arg0: i32) -> (i32, i32) {
    %c0_i32 = arith.constant 0 : i32
    %c0_i32_0 = arith.constant 0 : i32
    return %arg0, %c0_i32 : i32, i32
  }
}

</mosaic_0001>

<llo_original>
// kernel: tpu_custom_call.1
$region0: #{tpu_custom_call.1}
  #allocation0 [shape = 'u32[]', space=smem, size = 0x4, offset = 0x4, fixed_abs, tag = 'smem constant byte address 0x4 - core index']
  #allocation1 [shape = 'u32[144,128]{1,0:T(1,128)}', space=vmem, size = 0x12000, scoped, tag = 'internal scratch']
  %s0 = inlined_call_operand.vmem [shape: f32[16,3], index: 0, kind: input, shape index: {}]
  %s1 = inlined_call_operand.hbm [shape: f32[264,128], index: 1, kind: input, shape index: {}]
  %s2 = inlined_call_operand.vmem [shape: f32[16,8], index: 2, kind: output, shape index: {}]
  %s3 = sld [smem:[#allocation0]]
  $region45: #{tpu_custom_call.1} parent=0
    _
  %s5 = ssub.s32 1, %s3
  %s6 = scalar_select 0, %s5, %s3
  $region1: #{tpu_custom_call.1} parent=0
    #allocation2 [shape = 'u8[135168]{0}', space=vmem, size = 0x21000, scoped, tag = 'input window, operand 1, single buffered']
    #allocation3 [shape = 's32[2]{0}', space=sflag, size = 0x8, scoped, tag = 'scoped memory for tpu_custom_call.1']
    %7 = vsyncpa [#allocation3], 0
    loop: start=0, step=1, limit=4
    $region2: #{tpu_custom_call.1} parent=1 // loop_pre_header
      _
    $region3: #{tpu_custom_call.1} parent=1 // loop_header
      %s9 = sphi 0, %s13
      %p10 = scmp.ge.s32.totalorder %s9, 4
      %s19 = sphi 0, %s21
      %s22 = sphi 0, %s19
      %s23 = sphi 0, %s22
      %s39 = sphi 0, %s23
      %s43 = sphi 0, %s43
      %s45 = sphi 0, %s43
      %s46 = sphi 0, %s45
      %s60 = sphi 0, %s46
      %s66 = sphi 0, %s68
      %s69 = sphi 0, %s66
      %s70 = sphi 0, %s69
      %s86 = sphi 0, %s70
    $region4: #{tpu_custom_call.1} parent=1 // loop_header_branch
      %12 = sbr.rel (%p10) target = $region8
    $region5: #{tpu_custom_call.1} parent=1 // loop_body
      %s14 = ssub.s32 %s9, 1
      %s15 = ssub.s32 %s9, 2
      %s16 = sadd.s32 %s9, 1
      %s17 = ssub.s32 %s9, %s16
      %p18 = scmp.eq.s32.totalorder %s17, 0
      %s20 = sadd.s32 %s19, 1
      %s21 = scalar_select %p18, %s19, %s20
      %p24 = pneg %p18
      %p25 = scmp.eq.s32.totalorder %s9, 1
      %p26 = por %p24, %p25
      %p27 = scmp.ne.s32.totalorder %s19, %s22
      %p28 = scmp.eq.s32.totalorder %s9, 0
      %p29 = por %p27, %p28
      %p30 = scmp.ne.s32.totalorder %s19, %s22
      %p31 = scmp.eq.s32.totalorder %s14, 1
      %p32 = por %p30, %p31
      %p33 = scmp.ne.s32.totalorder %s22, %s23
      %p34 = scmp.eq.s32.totalorder %s14, 0
      %p35 = por %p33, %p34
      %p36 = scmp.ne.s32.totalorder %s22, %s23
      %p37 = scmp.eq.s32.totalorder %s15, 1
      %p38 = por %p36, %p37
      %p40 = scmp.ne.s32.totalorder %s23, %s39
      %p41 = scmp.eq.s32.totalorder %s15, 0
      %p42 = por %p40, %p41
      %s44 = sadd.s32 %s43, 1
      %p47 = scmp.eq.s32.totalorder %s9, 1
      %p48 = scmp.ne.s32.totalorder %s43, %s45
      %p49 = scmp.eq.s32.totalorder %s9, 0
      %p50 = por %p48, %p49
      %p51 = scmp.ne.s32.totalorder %s43, %s45
      %p52 = scmp.eq.s32.totalorder %s14, 1
      %p53 = por %p51, %p52
      %p54 = scmp.ne.s32.totalorder %s45, %s46
      %p55 = scmp.eq.s32.totalorder %s14, 0
      %p56 = por %p54, %p55
      %p57 = scmp.ne.s32.totalorder %s45, %s46
      %p58 = scmp.eq.s32.totalorder %s15, 1
      %p59 = por %p57, %p58
      %p61 = scmp.ne.s32.totalorder %s46, %s60
      %p62 = scmp.eq.s32.totalorder %s15, 0
      %p63 = por %p61, %p62
      %s64 = ssub.s32 %s9, %s16
      %p65 = scmp.eq.s32.totalorder %s64, 0
      %s67 = sadd.s32 %s66, 1
      %s68 = scalar_select %p65, %s66, %s67
      %p71 = pneg %p65
      %p72 = scmp.eq.s32.totalorder %s9, 1
      %p73 = por %p71, %p72
      %p74 = scmp.ne.s32.totalorder %s66, %s69
      %p75 = scmp.eq.s32.totalorder %s9, 0
      %p76 = por %p74, %p75
      %p77 = scmp.ne.s32.totalorder %s66, %s69
      %p78 = scmp.eq.s32.totalorder %s14, 1
      %p79 = por %p77, %p78
      %p80 = scmp.ne.s32.totalorder %s69, %s70
      %p81 = scmp.eq.s32.totalorder %s14, 0
      %p82 = por %p80, %p81
      %p83 = scmp.ne.s32.totalorder %s69, %s70
      %p84 = scmp.eq.s32.totalorder %s15, 1
      %p85 = por %p83, %p84
      %p87 = scmp.ne.s32.totalorder %s70, %s86
      %p88 = scmp.eq.s32.totalorder %s15, 0
      %p89 = por %p87, %p88
      %p90 = scmp.le.s32.totalorder 1, %s9
      %p91 = scmp.lt.s32.totalorder %s9, 3
      %p92 = pnand %p90, %p91
      %p93 = pneg %p92
      // Predicated region
      $region9: #{tpu_custom_call.1} parent=5 // pred_check
        _
      $region10: #{tpu_custom_call.1} parent=5 // pred_check_branch
        %95 = sbr.rel (%p92) target = $region12
      $region11: #{tpu_custom_call.1} parent=5 // pred_region
        %s96 = ssub.s32 %s9, 1
        // Predicated region
        $region13: #{tpu_custom_call.1} parent=11 // pred_check
          %p97 = pneg %p56
        $region14: #{tpu_custom_call.1} parent=11 // pred_check_branch
          %99 = sbr.rel (%p97) target = $region16
        $region15: #{tpu_custom_call.1} parent=11 // pred_region
          %s101 = ssub.s32 4224, 4224
          %102 = vsyncadd [#allocation3], %s101
          %s103 = sshll.u32 [#allocation2], 4
          %s104 = int_to_ptr.vmem [resolvable:$true] %s103
          %109 = dma.hbm_to_vmem [thread:$0]  %s1, 4224, %s104, [#allocation3], 128, 128, 8
        $region16: #{tpu_custom_call.1} parent=11 // pred_fallthru
          _
      $region12: #{tpu_custom_call.1} parent=5 // pred_fallthru
        _
      %p110 = scmp.lt.s32.totalorder %s9, 2
      // Predicated region
      $region17: #{tpu_custom_call.1} parent=5 // pred_check
        %p111 = pneg %p110
      $region18: #{tpu_custom_call.1} parent=5 // pred_check_branch
        %113 = sbr.rel (%p111) target = $region20
      $region19: #{tpu_custom_call.1} parent=5 // pred_region
        // Predicated region
        $region21: #{tpu_custom_call.1} parent=19 // pred_check
          %p114 = pneg %p29
        $region22: #{tpu_custom_call.1} parent=19 // pred_check_branch
          %116 = sbr.rel (%p114) target = $region24
        $region23: #{tpu_custom_call.1} parent=19 // pred_region
          %p117 = scmp.lt.s32.totalorder %s9, 1
          %s118 = scalar_select %p117, %s9, 1
          %s119 = smul.addr %s118, 8
          %s120 = scalar_lea.vmem %s0, %s119
        $region24: #{tpu_custom_call.1} parent=19 // pred_fallthru
          _
      $region20: #{tpu_custom_call.1} parent=5 // pred_fallthru
        _
      %p121 = scmp.le.s32.totalorder 1, %s9
      %p122 = scmp.lt.s32.totalorder %s9, 3
      %p123 = pnand %p121, %p122
      %p124 = pneg %p123
      // Predicated region
      $region25: #{tpu_custom_call.1} parent=5 // pred_check
        _
      $region26: #{tpu_custom_call.1} parent=5 // pred_check_branch
        %126 = sbr.rel (%p123) target = $region28
      $region27: #{tpu_custom_call.1} parent=5 // pred_region
        %s127 = ssub.s32 %s9, 1
        // Predicated region
        $region29: #{tpu_custom_call.1} parent=27 // pred_check
          %p128 = pneg %p56
        $region30: #{tpu_custom_call.1} parent=27 // pred_check_branch
          %130 = sbr.rel (%p128) target = $region32
        $region31: #{tpu_custom_call.1} parent=27 // pred_region
          %131 = dma.done [#allocation3], 4224
        $region32: #{tpu_custom_call.1} parent=27 // pred_fallthru
          _
        %p132 = scmp.lt.s32.totalorder %s14, 1
        %s133 = scalar_select %p132, %s14, 1
        %s134 = smul.addr %s133, 8
        %s135 = scalar_lea.vmem %s0, %s134
        %p136 = pneg %p35
        %p137 = pneg %p32
        %p138 = pneg %p56
        %p139 = pneg %p53
        %p140 = pneg %p82
        %p141 = pneg %p79
        %p142 = scmp.lt.s32.totalorder %s14, 1
        %s143 = scalar_select %p142, %s14, 1
        %s144 = smul.addr %s143, 8
        %s145 = scalar_lea.vmem %s2, %s144
        %p146 = scmp.lt.s32.totalorder %s14, 1
        %s147 = scalar_select %p146, %s14, 1
        %s148 = smul.addr %s147, 8
        %s149 = scalar_lea.vmem %s0, %s148
        %p150 = scmp.lt.s32.totalorder %s14, 1
        %s151 = scalar_select %p150, %s14, 1
        %s152 = smul.addr %s151, 8
        %s153 = scalar_lea.vmem %s2, %s152
        %v154 = vld [vmem:[%s149] sm:$0xff]
        %v155 = vld [vmem:[#allocation2 + $0x100] sm:$0x1]
        %157 = vset.pattern.permute.xlu0 0
        %158 = vperm.xlu0 %157, %v154
        %v159 = vpop.permute.xlu0 %158
        %v161 = vlaneseq
        %v162 = vshrl.u32 %v161, 7
        %v163 = vsub.s32 0, %v162
        %v164 = vrot.slane %v155, %v163
        %v165 = vmul.f32 %v159, %v164
        %v166 = vld [vmem:[#allocation2 + $0x101] sm:$0x1]
        %167 = vset.pattern.permute.xlu0 1
        %168 = vperm.xlu0 %167, %v154
        %v169 = vpop.permute.xlu0 %168
        %v171 = vlaneseq
        %v172 = vshrl.u32 %v171, 7
        %v173 = vsub.s32 0, %v172
        %v174 = vrot.slane %v166, %v173
        %v175 = vmul.f32 %v169, %v174
        %v176 = vld [vmem:[#allocation2 + $0x102] sm:$0x1]
        %177 = vset.pattern.permute.xlu0 2
        %178 = vperm.xlu0 %177, %v154
        %v179 = vpop.permute.xlu0 %178
        %v181 = vlaneseq
        %v182 = vshrl.u32 %v181, 7
        %v183 = vsub.s32 0, %v182
        %v184 = vrot.slane %v176, %v183
        %v185 = vmul.f32 %v179, %v184
        %v186 = vld [vmem:[#allocation2 + $0x103] sm:$0x1]
        %v187 = vadd.f32 %v165, %v175
        %v188 = vlaneseq
        %v189 = vshrl.u32 %v188, 7
        %v190 = vsub.s32 0, %v189
        %v191 = vrot.slane %v186, %v190
        %v192 = vadd.f32 %v185, %v191
        %v193 = vadd.f32 %v187, %v192
        %v194 = vmax.f32 %v193, 0.0
        %v195 = vld [vmem:[#allocation2] sm:$0xff]
        %v196 = vld [vmem:[#allocation2 + $0x8] sm:$0xff]
        %v197 = vld [vmem:[#allocation2 + $0x10] sm:$0xff]
        %v198 = vld [vmem:[#allocation2 + $0x18] sm:$0xff]
        %v199 = vld [vmem:[#allocation2 + $0x20] sm:$0xff]
        %v200 = vld [vmem:[#allocation2 + $0x28] sm:$0xff]
        %v201 = vld [vmem:[#allocation2 + $0x30] sm:$0xff]
        %v202 = vld [vmem:[#allocation2 + $0x38] sm:$0xff]
        %v203 = vld [vmem:[#allocation2 + $0x40] sm:$0xff]
        %v204 = vld [vmem:[#allocation2 + $0x48] sm:$0xff]
        %v205 = vld [vmem:[#allocation2 + $0x50] sm:$0xff]
        %v206 = vld [vmem:[#allocation2 + $0x58] sm:$0xff]
        %v207 = vld [vmem:[#allocation2 + $0x60] sm:$0xff]
        %v208 = vld [vmem:[#allocation2 + $0x68] sm:$0xff]
        %v209 = vld [vmem:[#allocation2 + $0x70] sm:$0xff]
        %v210 = vld [vmem:[#allocation2 + $0x78] sm:$0xff]
        %v211 = vld [vmem:[#allocation2 + $0x104] sm:$0x1]
        %v212 = vlaneseq
        %v213 = vshrl.u32 %v212, 7
        %v214 = vsub.s32 0, %v213
        %v215 = vrot.slane %v211, %v214
        %216 = vmatprep.subr.mxu0 0.0
        %v217 = vand.u32 %v210, 4294901760
        %218 = vmatpush1.msra.mxu0 %v217
        %219 = vmatprep.subr.mxu0 0.0
        %v220 = vand.u32 %v209, 4294901760
        %221 = vmatpush1.msra.mxu0 %v220
        %222 = vmatprep.subr.mxu0 0.0
        %v223 = vand.u32 %v208, 4294901760
        %224 = vmatpush1.msra.mxu0 %v223
        %225 = vmatprep.subr.mxu0 0.0
        %v226 = vand.u32 %v207, 4294901760
        %227 = vmatpush1.msra.mxu0 %v226
        %228 = vmatprep.subr.mxu0 0.0
        %v229 = vand.u32 %v206, 4294901760
        %230 = vmatpush1.msra.mxu0 %v229
        %231 = vmatprep.subr.mxu0 0.0
        %v232 = vand.u32 %v205, 4294901760
        %233 = vmatpush1.msra.mxu0 %v232
        %234 = vmatprep.subr.mxu0 0.0
        %v235 = vand.u32 %v204, 4294901760
        %236 = vmatpush1.msra.mxu0 %v235
        %237 = vmatprep.subr.mxu0 0.0
        %v238 = vand.u32 %v203, 4294901760
        %239 = vmatpush1.msra.mxu0 %v238
        %240 = vmatprep.subr.mxu0 0.0
        %v241 = vand.u32 %v202, 4294901760
        %242 = vmatpush1.msra.mxu0 %v241
        %243 = vmatprep.subr.mxu0 0.0
        %v244 = vand.u32 %v201, 4294901760
        %245 = vmatpush1.msra.mxu0 %v244
        %246 = vmatprep.subr.mxu0 0.0
        %v247 = vand.u32 %v200, 4294901760
        %248 = vmatpush1.msra.mxu0 %v247
        %249 = vmatprep.subr.mxu0 0.0
        %v250 = vand.u32 %v199, 4294901760
        %251 = vmatpush1.msra.mxu0 %v250
        %252 = vmatprep.subr.mxu0 0.0
        %v253 = vand.u32 %v198, 4294901760
        %254 = vmatpush1.msra.mxu0 %v253
        %255 = vmatprep.subr.mxu0 0.0
        %v256 = vand.u32 %v197, 4294901760
        %257 = vmatpush1.msra.mxu0 %v256
        %258 = vmatprep.subr.mxu0 0.0
        %v259 = vand.u32 %v196, 4294901760
        %260 = vmatpush1.msra.mxu0 %v259
        %261 = vmatprep.subr.mxu0 0.0
        %v262 = vand.u32 %v195, 4294901760
        %263 = vmatpush1.msra.mxu0 %v262
        %264 = vmatprep.subr.mxu0 0.0
        %265 = vmatpush2.msra.mxu0 0.0
        %266 = vmatprep.subr.mxu0 0.0
        %267 = vmatpush2.msra.mxu0 0.0
        %268 = vmatprep.subr.mxu0 0.0
        %269 = vmatpush2.msra.mxu0 0.0
        %270 = vmatprep.subr.mxu0 0.0
        %271 = vmatpush2.msra.mxu0 0.0
        %272 = vmatprep.subr.mxu0 0.0
        %273 = vmatpush2.msra.mxu0 0.0
        %274 = vmatprep.subr.mxu0 0.0
        %275 = vmatpush2.msra.mxu0 0.0
        %276 = vmatprep.subr.mxu0 0.0
        %277 = vmatpush2.msra.mxu0 0.0
        %278 = vmatprep.subr.mxu0 0.0
        %279 = vmatpush2.msra.mxu0 0.0
        %280 = vmatprep.subr.mxu0 0.0
        %281 = vmatpush2.msra.mxu0 0.0
        %282 = vmatprep.subr.mxu0 0.0
        %283 = vmatpush2.msra.mxu0 0.0
        %284 = vmatprep.subr.mxu0 0.0
        %285 = vmatpush2.msra.mxu0 0.0
        %286 = vmatprep.subr.mxu0 0.0
        %287 = vmatpush2.msra.mxu0 0.0
        %288 = vmatprep.subr.mxu0 0.0
        %289 = vmatpush2.msra.mxu0 0.0
        %290 = vmatprep.subr.mxu0 0.0
        %291 = vmatpush2.msra.mxu0 0.0
        %292 = vmatprep.subr.mxu0 0.0
        %293 = vmatpush2.msra.mxu0 0.0
        %294 = vmatprep.subr.mxu0 0.0
        %295 = vmatpush2.msra.mxu0 0.0
        %296 = vmatprep.mubr.f32.mxu0 0.0
        %v297 = vand.u32 %v194, 4294901760
        %v298 = vsub.f32 %v194, %v297
        %v299 = vand.u32 %v298, 4294901760
        %v300 = vsub.f32 %v298, %v299
        %v301 = vand.u32 %v300, 4294901760
        %302 = vmatmul.mubr.f32.gmra.mxu0 %v301
        %v303 = vpop.f32.mrf.mxu0
        %v304 = vadd.f32 %v215, %v303
        %v305 = vpop.f32.mrf.mxu0
        %306 = vdwg.mxu0
        %307 = vmatprep.subr.mxu0 0.0
        %v308 = vand.u32 %v210, 4294901760
        %v309 = vsub.f32 %v210, %v308
        %v310 = vand.u32 %v309, 4294901760
        %v311 = vsub.f32 %v309, %v310
        %v312 = vand.u32 %v311, 4294901760
        %313 = vmatpush1.msra.mxu0 %v312
        %314 = vmatprep.subr.mxu0 0.0
        %v315 = vand.u32 %v209, 4294901760
        %v316 = vsub.f32 %v209, %v315
        %v317 = vand.u32 %v316, 4294901760
        %v318 = vsub.f32 %v316, %v317
        %v319 = vand.u32 %v318, 4294901760
        %320 = vmatpush1.msra.mxu0 %v319
        %321 = vmatprep.subr.mxu0 0.0
        %v322 = vand.u32 %v208, 4294901760
        %v323 = vsub.f32 %v208, %v322
        %v324 = vand.u32 %v323, 4294901760
        %v325 = vsub.f32 %v323, %v324
        %v326 = vand.u32 %v325, 4294901760
        %327 = vmatpush1.msra.mxu0 %v326
        %328 = vmatprep.subr.mxu0 0.0
        %v329 = vand.u32 %v207, 4294901760
        %v330 = vsub.f32 %v207, %v329
        %v331 = vand.u32 %v330, 4294901760
        %v332 = vsub.f32 %v330, %v331
        %v333 = vand.u32 %v332, 4294901760
        %334 = vmatpush1.msra.mxu0 %v333
        %335 = vmatprep.subr.mxu0 0.0
        %v336 = vand.u32 %v206, 4294901760
        %v337 = vsub.f32 %v206, %v336
        %v338 = vand.u32 %v337, 4294901760
        %v339 = vsub.f32 %v337, %v338
        %v340 = vand.u32 %v339, 4294901760
        %341 = vmatpush1.msra.mxu0 %v340
        %342 = vmatprep.subr.mxu0 0.0
        %v343 = vand.u32 %v205, 4294901760
        %v344 = vsub.f32 %v205, %v343
        %v345 = vand.u32 %v344, 4294901760
        %v346 = vsub.f32 %v344, %v345
        %v347 = vand.u32 %v346, 4294901760
        %348 = vmatpush1.msra.mxu0 %v347
        %349 = vmatprep.subr.mxu0 0.0
        %v350 = vand.u32 %v204, 4294901760
        %v351 = vsub.f32 %v204, %v350
        %v352 = vand.u32 %v351, 4294901760
        %v353 = vsub.f32 %v351, %v352
        %v354 = vand.u32 %v353, 4294901760
        %355 = vmatpush1.msra.mxu0 %v354
        %356 = vmatprep.subr.mxu0 0.0
        %v357 = vand.u32 %v203, 4294901760
        %v358 = vsub.f32 %v203, %v357
        %v359 = vand.u32 %v358, 4294901760
        %v360 = vsub.f32 %v358, %v359
        %v361 = vand.u32 %v360, 4294901760
        %362 = vmatpush1.msra.mxu0 %v361
        %363 = vmatprep.subr.mxu0 0.0
        %v364 = vand.u32 %v202, 4294901760
        %v365 = vsub.f32 %v202, %v364
        %v366 = vand.u32 %v365, 4294901760
        %v367 = vsub.f32 %v365, %v366
        %v368 = vand.u32 %v367, 4294901760
        %369 = vmatpush1.msra.mxu0 %v368
        %370 = vmatprep.subr.mxu0 0.0
        %v371 = vand.u32 %v201, 4294901760
        %v372 = vsub.f32 %v201, %v371
        %v373 = vand.u32 %v372, 4294901760
        %v374 = vsub.f32 %v372, %v373
        %v375 = vand.u32 %v374, 4294901760
        %376 = vmatpush1.msra.mxu0 %v375
        %377 = vmatprep.subr.mxu0 0.0
        %v378 = vand.u32 %v200, 4294901760
        %v379 = vsub.f32 %v200, %v378
        %v380 = vand.u32 %v379, 4294901760
        %v381 = vsub.f32 %v379, %v380
        %v382 = vand.u32 %v381, 4294901760
        %383 = vmatpush1.msra.mxu0 %v382
        %384 = vmatprep.subr.mxu0 0.0
        %v385 = vand.u32 %v199, 4294901760
        %v386 = vsub.f32 %v199, %v385
        %v387 = vand.u32 %v386, 4294901760
        %v388 = vsub.f32 %v386, %v387
        %v389 = vand.u32 %v388, 4294901760
        %390 = vmatpush1.msra.mxu0 %v389
        %391 = vmatprep.subr.mxu0 0.0
        %v392 = vand.u32 %v198, 4294901760
        %v393 = vsub.f32 %v198, %v392
        %v394 = vand.u32 %v393, 4294901760
        %v395 = vsub.f32 %v393, %v394
        %v396 = vand.u32 %v395, 4294901760
        %397 = vmatpush1.msra.mxu0 %v396
        %398 = vmatprep.subr.mxu0 0.0
        %v399 = vand.u32 %v197, 4294901760
        %v400 = vsub.f32 %v197, %v399
        %v401 = vand.u32 %v400, 4294901760
        %v402 = vsub.f32 %v400, %v401
        %v403 = vand.u32 %v402, 4294901760
        %404 = vmatpush1.msra.mxu0 %v403
        %405 = vmatprep.subr.mxu0 0.0
        %v406 = vand.u32 %v196, 4294901760
        %v407 = vsub.f32 %v196, %v406
        %v408 = vand.u32 %v407, 4294901760
        %v409 = vsub.f32 %v407, %v408
        %v410 = vand.u32 %v409, 4294901760
        %411 = vmatpush1.msra.mxu0 %v410
        %412 = vmatprep.subr.mxu0 0.0
        %v413 = vand.u32 %v195, 4294901760
        %v414 = vsub.f32 %v195, %v413
        %v415 = vand.u32 %v414, 4294901760
        %v416 = vsub.f32 %v414, %v415
        %v417 = vand.u32 %v416, 4294901760
        %418 = vmatpush1.msra.mxu0 %v417
        %419 = vmatprep.subr.mxu0 0.0
        %420 = vmatpush2.msra.mxu0 0.0
        %421 = vmatprep.subr.mxu0 0.0
        %422 = vmatpush2.msra.mxu0 0.0
        %423 = vmatprep.subr.mxu0 0.0
        %424 = vmatpush2.msra.mxu0 0.0
        %425 = vmatprep.subr.mxu0 0.0
        %426 = vmatpush2.msra.mxu0 0.0
        %427 = vmatprep.subr.mxu0 0.0
        %428 = vmatpush2.msra.mxu0 0.0
        %429 = vmatprep.subr.mxu0 0.0
        %430 = vmatpush2.msra.mxu0 0.0
        %431 = vmatprep.subr.mxu0 0.0
        %432 = vmatpush2.msra.mxu0 0.0
        %433 = vmatprep.subr.mxu0 0.0
        %434 = vmatpush2.msra.mxu0 0.0
        %435 = vmatprep.subr.mxu0 0.0
        %436 = vmatpush2.msra.mxu0 0.0
        %437 = vmatprep.subr.mxu0 0.0
        %438 = vmatpush2.msra.mxu0 0.0
        %439 = vmatprep.subr.mxu0 0.0
        %440 = vmatpush2.msra.mxu0 0.0
        %441 = vmatprep.subr.mxu0 0.0
        %442 = vmatpush2.msra.mxu0 0.0
        %443 = vmatprep.subr.mxu0 0.0
        %444 = vmatpush2.msra.mxu0 0.0
        %445 = vmatprep.subr.mxu0 0.0
        %446 = vmatpush2.msra.mxu0 0.0
        %447 = vmatprep.subr.mxu0 0.0
        %448 = vmatpush2.msra.mxu0 0.0
        %449 = vmatprep.subr.mxu0 0.0
        %450 = vmatpush2.msra.mxu0 0.0
        %451 = vmatprep.mubr.f32.mxu0 0.0
        %v452 = vand.u32 %v194, 4294901760
        %453 = vmatmul.mubr.f32.gmra.mxu0 %v452
        %v454 = vpop.f32.mrf.mxu0
        %v455 = vadd.f32 %v304, %v454
        %v456 = vpop.f32.mrf.mxu0
        %457 = vdwg.mxu0
        %458 = vmatprep.subr.mxu0 0.0
        %v459 = vand.u32 %v210, 4294901760
        %v460 = vsub.f32 %v210, %v459
        %461 = vmatpush1.msra.mxu0 %v460
        %462 = vmatprep.subr.mxu0 0.0
        %v463 = vand.u32 %v209, 4294901760
        %v464 = vsub.f32 %v209, %v463
        %465 = vmatpush1.msra.mxu0 %v464
        %466 = vmatprep.subr.mxu0 0.0
        %v467 = vand.u32 %v208, 4294901760
        %v468 = vsub.f32 %v208, %v467
        %469 = vmatpush1.msra.mxu0 %v468
        %470 = vmatprep.subr.mxu0 0.0
        %v471 = vand.u32 %v207, 4294901760
        %v472 = vsub.f32 %v207, %v471
        %473 = vmatpush1.msra.mxu0 %v472
        %474 = vmatprep.subr.mxu0 0.0
        %v475 = vand.u32 %v206, 4294901760
        %v476 = vsub.f32 %v206, %v475
        %477 = vmatpush1.msra.mxu0 %v476
        %478 = vmatprep.subr.mxu0 0.0
        %v479 = vand.u32 %v205, 4294901760
        %v480 = vsub.f32 %v205, %v479
        %481 = vmatpush1.msra.mxu0 %v480
        %482 = vmatprep.subr.mxu0 0.0
        %v483 = vand.u32 %v204, 4294901760
        %v484 = vsub.f32 %v204, %v483
        %485 = vmatpush1.msra.mxu0 %v484
        %486 = vmatprep.subr.mxu0 0.0
        %v487 = vand.u32 %v203, 4294901760
        %v488 = vsub.f32 %v203, %v487
        %489 = vmatpush1.msra.mxu0 %v488
        %490 = vmatprep.subr.mxu0 0.0
        %v491 = vand.u32 %v202, 4294901760
        %v492 = vsub.f32 %v202, %v491
        %493 = vmatpush1.msra.mxu0 %v492
        %494 = vmatprep.subr.mxu0 0.0
        %v495 = vand.u32 %v201, 4294901760
        %v496 = vsub.f32 %v201, %v495
        %497 = vmatpush1.msra.mxu0 %v496
        %498 = vmatprep.subr.mxu0 0.0
        %v499 = vand.u32 %v200, 4294901760
        %v500 = vsub.f32 %v200, %v499
        %501 = vmatpush1.msra.mxu0 %v500
        %502 = vmatprep.subr.mxu0 0.0
        %v503 = vand.u32 %v199, 4294901760
        %v504 = vsub.f32 %v199, %v503
        %505 = vmatpush1.msra.mxu0 %v504
        %506 = vmatprep.subr.mxu0 0.0
        %v507 = vand.u32 %v198, 4294901760
        %v508 = vsub.f32 %v198, %v507
        %509 = vmatpush1.msra.mxu0 %v508
        %510 = vmatprep.subr.mxu0 0.0
        %v511 = vand.u32 %v197, 4294901760
        %v512 = vsub.f32 %v197, %v511
        %513 = vmatpush1.msra.mxu0 %v512
        %514 = vmatprep.subr.mxu0 0.0
        %v515 = vand.u32 %v196, 4294901760
        %v516 = vsub.f32 %v196, %v515
        %517 = vmatpush1.msra.mxu0 %v516
        %518 = vmatprep.subr.mxu0 0.0
        %v519 = vand.u32 %v195, 4294901760
        %v520 = vsub.f32 %v195, %v519
        %521 = vmatpush1.msra.mxu0 %v520
        %522 = vmatprep.subr.mxu0 0.0
        %523 = vmatpush2.msra.mxu0 0.0
        %524 = vmatprep.subr.mxu0 0.0
        %525 = vmatpush2.msra.mxu0 0.0
        %526 = vmatprep.subr.mxu0 0.0
        %527 = vmatpush2.msra.mxu0 0.0
        %528 = vmatprep.subr.mxu0 0.0
        %529 = vmatpush2.msra.mxu0 0.0
        %530 = vmatprep.subr.mxu0 0.0
        %531 = vmatpush2.msra.mxu0 0.0
        %532 = vmatprep.subr.mxu0 0.0
        %533 = vmatpush2.msra.mxu0 0.0
        %534 = vmatprep.subr.mxu0 0.0
        %535 = vmatpush2.msra.mxu0 0.0
        %536 = vmatprep.subr.mxu0 0.0
        %537 = vmatpush2.msra.mxu0 0.0
        %538 = vmatprep.subr.mxu0 0.0
        %539 = vmatpush2.msra.mxu0 0.0
        %540 = vmatprep.subr.mxu0 0.0
        %541 = vmatpush2.msra.mxu0 0.0
        %542 = vmatprep.subr.mxu0 0.0
        %543 = vmatpush2.msra.mxu0 0.0
        %544 = vmatprep.subr.mxu0 0.0
        %545 = vmatpush2.msra.mxu0 0.0
        %546 = vmatprep.subr.mxu0 0.0
        %547 = vmatpush2.msra.mxu0 0.0
        %548 = vmatprep.subr.mxu0 0.0
        %549 = vmatpush2.msra.mxu0 0.0
        %550 = vmatprep.subr.mxu0 0.0
        %551 = vmatpush2.msra.mxu0 0.0
        %552 = vmatprep.subr.mxu0 0.0
        %553 = vmatpush2.msra.mxu0 0.0
        %554 = vmatprep.mubr.f32.mxu0 0.0
        %v555 = vand.u32 %v194, 4294901760
        %v556 = vsub.f32 %v194, %v555
        %557 = vmatmul.mubr.f32.gmra.mxu0 %v556
        %v558 = vpop.f32.mrf.mxu0
        %v559 = vadd.f32 %v455, %v558
        %v560 = vpop.f32.mrf.mxu0
        %561 = vdwg.mxu0
        %562 = vmatprep.subr.mxu0 0.0
        %v563 = vand.u32 %v210, 4294901760
        %564 = vmatpush1.msra.mxu0 %v563
        %565 = vmatprep.subr.mxu0 0.0
        %v566 = vand.u32 %v209, 4294901760
        %567 = vmatpush1.msra.mxu0 %v566
        %568 = vmatprep.subr.mxu0 0.0
        %v569 = vand.u32 %v208, 4294901760
        %570 = vmatpush1.msra.mxu0 %v569
        %571 = vmatprep.subr.mxu0 0.0
        %v572 = vand.u32 %v207, 4294901760
        %573 = vmatpush1.msra.mxu0 %v572
        %574 = vmatprep.subr.mxu0 0.0
        %v575 = vand.u32 %v206, 4294901760
        %576 = vmatpush1.msra.mxu0 %v575
        %577 = vmatprep.subr.mxu0 0.0
        %v578 = vand.u32 %v205, 4294901760
        %579 = vmatpush1.msra.mxu0 %v578
        %580 = vmatprep.subr.mxu0 0.0
        %v581 = vand.u32 %v204, 4294901760
        %582 = vmatpush1.msra.mxu0 %v581
        %583 = vmatprep.subr.mxu0 0.0
        %v584 = vand.u32 %v203, 4294901760
        %585 = vmatpush1.msra.mxu0 %v584
        %586 = vmatprep.subr.mxu0 0.0
        %v587 = vand.u32 %v202, 4294901760
        %588 = vmatpush1.msra.mxu0 %v587
        %589 = vmatprep.subr.mxu0 0.0
        %v590 = vand.u32 %v201, 4294901760
        %591 = vmatpush1.msra.mxu0 %v590
        %592 = vmatprep.subr.mxu0 0.0
        %v593 = vand.u32 %v200, 4294901760
        %594 = vmatpush1.msra.mxu0 %v593
        %595 = vmatprep.subr.mxu0 0.0
        %v596 = vand.u32 %v199, 4294901760
        %597 = vmatpush1.msra.mxu0 %v596
        %598 = vmatprep.subr.mxu0 0.0
        %v599 = vand.u32 %v198, 4294901760
        %600 = vmatpush1.msra.mxu0 %v599
        %601 = vmatprep.subr.mxu0 0.0
        %v602 = vand.u32 %v197, 4294901760
        %603 = vmatpush1.msra.mxu0 %v602
        %604 = vmatprep.subr.mxu0 0.0
        %v605 = vand.u32 %v196, 4294901760
        %606 = vmatpush1.msra.mxu0 %v605
        %607 = vmatprep.subr.mxu0 0.0
        %v608 = vand.u32 %v195, 4294901760
        %609 = vmatpush1.msra.mxu0 %v608
        %610 = vmatprep.subr.mxu0 0.0
        %611 = vmatpush2.msra.mxu0 0.0
        %612 = vmatprep.subr.mxu0 0.0
        %613 = vmatpush2.msra.mxu0 0.0
        %614 = vmatprep.subr.mxu0 0.0
        %615 = vmatpush2.msra.mxu0 0.0
        %616 = vmatprep.subr.mxu0 0.0
        %617 = vmatpush2.msra.mxu0 0.0
        %618 = vmatprep.subr.mxu0 0.0
        %619 = vmatpush2.msra.mxu0 0.0
        %620 = vmatprep.subr.mxu0 0.0
        %621 = vmatpush2.msra.mxu0 0.0
        %622 = vmatprep.subr.mxu0 0.0
        %623 = vmatpush2.msra.mxu0 0.0
        %624 = vmatprep.subr.mxu0 0.0
        %625 = vmatpush2.msra.mxu0 0.0
        %626 = vmatprep.subr.mxu0 0.0
        %627 = vmatpush2.msra.mxu0 0.0
        %628 = vmatprep.subr.mxu0 0.0
        %629 = vmatpush2.msra.mxu0 0.0
        %630 = vmatprep.subr.mxu0 0.0
        %631 = vmatpush2.msra.mxu0 0.0
        %632 = vmatprep.subr.mxu0 0.0
        %633 = vmatpush2.msra.mxu0 0.0
        %634 = vmatprep.subr.mxu0 0.0
        %635 = vmatpush2.msra.mxu0 0.0
        %636 = vmatprep.subr.mxu0 0.0
        %637 = vmatpush2.msra.mxu0 0.0
        %638 = vmatprep.subr.mxu0 0.0
        %639 = vmatpush2.msra.mxu0 0.0
        %640 = vmatprep.subr.mxu0 0.0
        %641 = vmatpush2.msra.mxu0 0.0
        %642 = vmatprep.mubr.f32.mxu0 0.0
        %v643 = vand.u32 %v194, 4294901760
        %v644 = vsub.f32 %v194, %v643
        %v645 = vand.u32 %v644, 4294901760
        %646 = vmatmul.mubr.f32.gmra.mxu0 %v645
        %v647 = vpop.f32.mrf.mxu0
        %v648 = vadd.f32 %v559, %v647
        %v649 = vpop.f32.mrf.mxu0
        %650 = vdwg.mxu0
        %651 = vmatprep.subr.mxu0 0.0
        %v652 = vand.u32 %v210, 4294901760
        %v653 = vsub.f32 %v210, %v652
        %v654 = vand.u32 %v653, 4294901760
        %655 = vmatpush1.msra.mxu0 %v654
        %656 = vmatprep.subr.mxu0 0.0
        %v657 = vand.u32 %v209, 4294901760
        %v658 = vsub.f32 %v209, %v657
        %v659 = vand.u32 %v658, 4294901760
        %660 = vmatpush1.msra.mxu0 %v659
        %661 = vmatprep.subr.mxu0 0.0
        %v662 = vand.u32 %v208, 4294901760
        %v663 = vsub.f32 %v208, %v662
        %v664 = vand.u32 %v663, 4294901760
        %665 = vmatpush1.msra.mxu0 %v664
        %666 = vmatprep.subr.mxu0 0.0
        %v667 = vand.u32 %v207, 4294901760
        %v668 = vsub.f32 %v207, %v667
        %v669 = vand.u32 %v668, 4294901760
        %670 = vmatpush1.msra.mxu0 %v669
        %671 = vmatprep.subr.mxu0 0.0
        %v672 = vand.u32 %v206, 4294901760
        %v673 = vsub.f32 %v206, %v672
        %v674 = vand.u32 %v673, 4294901760
        %675 = vmatpush1.msra.mxu0 %v674
        %676 = vmatprep.subr.mxu0 0.0
        %v677 = vand.u32 %v205, 4294901760
        %v678 = vsub.f32 %v205, %v677
        %v679 = vand.u32 %v678, 4294901760
        %680 = vmatpush1.msra.mxu0 %v679
        %681 = vmatprep.subr.mxu0 0.0
        %v682 = vand.u32 %v204, 4294901760
        %v683 = vsub.f32 %v204, %v682
        %v684 = vand.u32 %v683, 4294901760
        %685 = vmatpush1.msra.mxu0 %v684
        %686 = vmatprep.subr.mxu0 0.0
        %v687 = vand.u32 %v203, 4294901760
        %v688 = vsub.f32 %v203, %v687
        %v689 = vand.u32 %v688, 4294901760
        %690 = vmatpush1.msra.mxu0 %v689
        %691 = vmatprep.subr.mxu0 0.0
        %v692 = vand.u32 %v202, 4294901760
        %v693 = vsub.f32 %v202, %v692
        %v694 = vand.u32 %v693, 4294901760
        %695 = vmatpush1.msra.mxu0 %v694
        %696 = vmatprep.subr.mxu0 0.0
        %v697 = vand.u32 %v201, 4294901760
        %v698 = vsub.f32 %v201, %v697
        %v699 = vand.u32 %v698, 4294901760
        %700 = vmatpush1.msra.mxu0 %v699
        %701 = vmatprep.subr.mxu0 0.0
        %v702 = vand.u32 %v200, 4294901760
        %v703 = vsub.f32 %v200, %v702
        %v704 = vand.u32 %v703, 4294901760
        %705 = vmatpush1.msra.mxu0 %v704
        %706 = vmatprep.subr.mxu0 0.0
        %v707 = vand.u32 %v199, 4294901760
        %v708 = vsub.f32 %v199, %v707
        %v709 = vand.u32 %v708, 4294901760
        %710 = vmatpush1.msra.mxu0 %v709
        %711 = vmatprep.subr.mxu0 0.0
        %v712 = vand.u32 %v198, 4294901760
        %v713 = vsub.f32 %v198, %v712
        %v714 = vand.u32 %v713, 4294901760
        %715 = vmatpush1.msra.mxu0 %v714
        %716 = vmatprep.subr.mxu0 0.0
        %v717 = vand.u32 %v197, 4294901760
        %v718 = vsub.f32 %v197, %v717
        %v719 = vand.u32 %v718, 4294901760
        %720 = vmatpush1.msra.mxu0 %v719
        %721 = vmatprep.subr.mxu0 0.0
        %v722 = vand.u32 %v196, 4294901760
        %v723 = vsub.f32 %v196, %v722
        %v724 = vand.u32 %v723, 4294901760
        %725 = vmatpush1.msra.mxu0 %v724
        %726 = vmatprep.subr.mxu0 0.0
        %v727 = vand.u32 %v195, 4294901760
        %v728 = vsub.f32 %v195, %v727
        %v729 = vand.u32 %v728, 4294901760
        %730 = vmatpush1.msra.mxu0 %v729
        %731 = vmatprep.subr.mxu0 0.0
        %732 = vmatpush2.msra.mxu0 0.0
        %733 = vmatprep.subr.mxu0 0.0
        %734 = vmatpush2.msra.mxu0 0.0
        %735 = vmatprep.subr.mxu0 0.0
        %736 = vmatpush2.msra.mxu0 0.0
        %737 = vmatprep.subr.mxu0 0.0
        %738 = vmatpush2.msra.mxu0 0.0
        %739 = vmatprep.subr.mxu0 0.0
        %740 = vmatpush2.msra.mxu0 0.0
        %741 = vmatprep.subr.mxu0 0.0
        %742 = vmatpush2.msra.mxu0 0.0
        %743 = vmatprep.subr.mxu0 0.0
        %744 = vmatpush2.msra.mxu0 0.0
        %745 = vmatprep.subr.mxu0 0.0
        %746 = vmatpush2.msra.mxu0 0.0
        %747 = vmatprep.subr.mxu0 0.0
        %748 = vmatpush2.msra.mxu0 0.0
        %749 = vmatprep.subr.mxu0 0.0
        %750 = vmatpush2.msra.mxu0 0.0
        %751 = vmatprep.subr.mxu0 0.0
        %752 = vmatpush2.msra.mxu0 0.0
        %753 = vmatprep.subr.mxu0 0.0
        %754 = vmatpush2.msra.mxu0 0.0
        %755 = vmatprep.subr.mxu0 0.0
        %756 = vmatpush2.msra.mxu0 0.0
        %757 = vmatprep.subr.mxu0 0.0
        %758 = vmatpush2.msra.mxu0 0.0
        %759 = vmatprep.subr.mxu0 0.0
        %760 = vmatpush2.msra.mxu0 0.0
        %761 = vmatprep.subr.mxu0 0.0
        %762 = vmatpush2.msra.mxu0 0.0
        %763 = vmatprep.mubr.f32.mxu0 0.0
        %v764 = vand.u32 %v194, 4294901760
        %765 = vmatmul.mubr.f32.gmra.mxu0 %v764
        %v766 = vpop.f32.mrf.mxu0
        %v767 = vadd.f32 %v648, %v766
        %v768 = vpop.f32.mrf.mxu0
        %769 = vdwg.mxu0
        %770 = vmatprep.subr.mxu0 0.0
        %v771 = vand.u32 %v210, 4294901760
        %772 = vmatpush1.msra.mxu0 %v771
        %773 = vmatprep.subr.mxu0 0.0
        %v774 = vand.u32 %v209, 4294901760
        %775 = vmatpush1.msra.mxu0 %v774
        %776 = vmatprep.subr.mxu0 0.0
        %v777 = vand.u32 %v208, 4294901760
        %778 = vmatpush1.msra.mxu0 %v777
        %779 = vmatprep.subr.mxu0 0.0
        %v780 = vand.u32 %v207, 4294901760
        %781 = vmatpush1.msra.mxu0 %v780
        %782 = vmatprep.subr.mxu0 0.0
        %v783 = vand.u32 %v206, 4294901760
        %784 = vmatpush1.msra.mxu0 %v783
        %785 = vmatprep.subr.mxu0 0.0
        %v786 = vand.u32 %v205, 4294901760
        %787 = vmatpush1.msra.mxu0 %v786
        %788 = vmatprep.subr.mxu0 0.0
        %v789 = vand.u32 %v204, 4294901760
        %790 = vmatpush1.msra.mxu0 %v789
        %791 = vmatprep.subr.mxu0 0.0
        %v792 = vand.u32 %v203, 4294901760
        %793 = vmatpush1.msra.mxu0 %v792
        %794 = vmatprep.subr.mxu0 0.0
        %v795 = vand.u32 %v202, 4294901760
        %796 = vmatpush1.msra.mxu0 %v795
        %797 = vmatprep.subr.mxu0 0.0
        %v798 = vand.u32 %v201, 4294901760
        %799 = vmatpush1.msra.mxu0 %v798
        %800 = vmatprep.subr.mxu0 0.0
        %v801 = vand.u32 %v200, 4294901760
        %802 = vmatpush1.msra.mxu0 %v801
        %803 = vmatprep.subr.mxu0 0.0
        %v804 = vand.u32 %v199, 4294901760
        %805 = vmatpush1.msra.mxu0 %v804
        %806 = vmatprep.subr.mxu0 0.0
        %v807 = vand.u32 %v198, 4294901760
        %808 = vmatpush1.msra.mxu0 %v807
        %809 = vmatprep.subr.mxu0 0.0
        %v810 = vand.u32 %v197, 4294901760
        %811 = vmatpush1.msra.mxu0 %v810
        %812 = vmatprep.subr.mxu0 0.0
        %v813 = vand.u32 %v196, 4294901760
        %814 = vmatpush1.msra.mxu0 %v813
        %815 = vmatprep.subr.mxu0 0.0
        %v816 = vand.u32 %v195, 4294901760
        %817 = vmatpush1.msra.mxu0 %v816
        %818 = vmatprep.subr.mxu0 0.0
        %819 = vmatpush2.msra.mxu0 0.0
        %820 = vmatprep.subr.mxu0 0.0
        %821 = vmatpush2.msra.mxu0 0.0
        %822 = vmatprep.subr.mxu0 0.0
        %823 = vmatpush2.msra.mxu0 0.0
        %824 = vmatprep.subr.mxu0 0.0
        %825 = vmatpush2.msra.mxu0 0.0
        %826 = vmatprep.subr.mxu0 0.0
        %827 = vmatpush2.msra.mxu0 0.0
        %828 = vmatprep.subr.mxu0 0.0
        %829 = vmatpush2.msra.mxu0 0.0
        %830 = vmatprep.subr.mxu0 0.0
        %831 = vmatpush2.msra.mxu0 0.0
        %832 = vmatprep.subr.mxu0 0.0
        %833 = vmatpush2.msra.mxu0 0.0
        %834 = vmatprep.subr.mxu0 0.0
        %835 = vmatpush2.msra.mxu0 0.0
        %836 = vmatprep.subr.mxu0 0.0
        %837 = vmatpush2.msra.mxu0 0.0
        %838 = vmatprep.subr.mxu0 0.0
        %839 = vmatpush2.msra.mxu0 0.0
        %840 = vmatprep.subr.mxu0 0.0
        %841 = vmatpush2.msra.mxu0 0.0
        %842 = vmatprep.subr.mxu0 0.0
        %843 = vmatpush2.msra.mxu0 0.0
        %844 = vmatprep.subr.mxu0 0.0
        %845 = vmatpush2.msra.mxu0 0.0
        %846 = vmatprep.subr.mxu0 0.0
        %847 = vmatpush2.msra.mxu0 0.0
        %848 = vmatprep.subr.mxu0 0.0
        %849 = vmatpush2.msra.mxu0 0.0
        %850 = vmatprep.mubr.f32.mxu0 0.0
        %v851 = vand.u32 %v194, 4294901760
        %852 = vmatmul.mubr.f32.gmra.mxu0 %v851
        %v853 = vpop.f32.mrf.mxu0
        %v854 = vadd.f32 %v767, %v853
        %v855 = vpop.f32.mrf.mxu0
        %856 = vdwg.mxu0
        %v857 = vmax.f32 %v854, 0.0
        %v858 = vld [vmem:[#allocation2 + $0x80] sm:$0xff]
        %v859 = vld [vmem:[#allocation2 + $0x88] sm:$0xff]
        %v860 = vld [vmem:[#allocation2 + $0x90] sm:$0xff]
        %v861 = vld [vmem:[#allocation2 + $0x98] sm:$0xff]
        %v862 = vld [vmem:[#allocation2 + $0xa0] sm:$0xff]
        %v863 = vld [vmem:[#allocation2 + $0xa8] sm:$0xff]
        %v864 = vld [vmem:[#allocation2 + $0xb0] sm:$0xff]
        %v865 = vld [vmem:[#allocation2 + $0xb8] sm:$0xff]
        %v866 = vld [vmem:[#allocation2 + $0xc0] sm:$0xff]
        %v867 = vld [vmem:[#allocation2 + $0xc8] sm:$0xff]
        %v868 = vld [vmem:[#allocation2 + $0xd0] sm:$0xff]
        %v869 = vld [vmem:[#allocation2 + $0xd8] sm:$0xff]
        %v870 = vld [vmem:[#allocation2 + $0xe0] sm:$0xff]
        %v871 = vld [vmem:[#allocation2 + $0xe8] sm:$0xff]
        %v872 = vld [vmem:[#allocation2 + $0xf0] sm:$0xff]
        %v873 = vld [vmem:[#allocation2 + $0xf8] sm:$0xff]
        %v874 = vld [vmem:[#allocation2 + $0x105] sm:$0x1]
        %875 = vmatprep.subr.mxu0 0.0
        %v876 = vand.u32 %v873, 4294901760
        %877 = vmatpush1.msra.mxu0 %v876
        %878 = vmatprep.subr.mxu0 0.0
        %v879 = vand.u32 %v872, 4294901760
        %880 = vmatpush1.msra.mxu0 %v879
        %881 = vmatprep.subr.mxu0 0.0
        %v882 = vand.u32 %v871, 4294901760
        %883 = vmatpush1.msra.mxu0 %v882
        %884 = vmatprep.subr.mxu0 0.0
        %v885 = vand.u32 %v870, 4294901760
        %886 = vmatpush1.msra.mxu0 %v885
        %887 = vmatprep.subr.mxu0 0.0
        %v888 = vand.u32 %v869, 4294901760
        %889 = vmatpush1.msra.mxu0 %v888
        %890 = vmatprep.subr.mxu0 0.0
        %v891 = vand.u32 %v868, 4294901760
        %892 = vmatpush1.msra.mxu0 %v891
        %893 = vmatprep.subr.mxu0 0.0
        %v894 = vand.u32 %v867, 4294901760
        %895 = vmatpush1.msra.mxu0 %v894
        %896 = vmatprep.subr.mxu0 0.0
        %v897 = vand.u32 %v866, 4294901760
        %898 = vmatpush1.msra.mxu0 %v897
        %899 = vmatprep.subr.mxu0 0.0
        %v900 = vand.u32 %v865, 4294901760
        %901 = vmatpush1.msra.mxu0 %v900
        %902 = vmatprep.subr.mxu0 0.0
        %v903 = vand.u32 %v864, 4294901760
        %904 = vmatpush1.msra.mxu0 %v903
        %905 = vmatprep.subr.mxu0 0.0
        %v906 = vand.u32 %v863, 4294901760
        %907 = vmatpush1.msra.mxu0 %v906
        %908 = vmatprep.subr.mxu0 0.0
        %v909 = vand.u32 %v862, 4294901760
        %910 = vmatpush1.msra.mxu0 %v909
        %911 = vmatprep.subr.mxu0 0.0
        %v912 = vand.u32 %v861, 4294901760
        %913 = vmatpush1.msra.mxu0 %v912
        %914 = vmatprep.subr.mxu0 0.0
        %v915 = vand.u32 %v860, 4294901760
        %916 = vmatpush1.msra.mxu0 %v915
        %917 = vmatprep.subr.mxu0 0.0
        %v918 = vand.u32 %v859, 4294901760
        %919 = vmatpush1.msra.mxu0 %v918
        %920 = vmatprep.subr.mxu0 0.0
        %v921 = vand.u32 %v858, 4294901760
        %922 = vmatpush1.msra.mxu0 %v921
        %923 = vmatprep.subr.mxu0 0.0
        %924 = vmatpush2.msra.mxu0 0.0
        %925 = vmatprep.subr.mxu0 0.0
        %926 = vmatpush2.msra.mxu0 0.0
        %927 = vmatprep.subr.mxu0 0.0
        %928 = vmatpush2.msra.mxu0 0.0
        %929 = vmatprep.subr.mxu0 0.0
        %930 = vmatpush2.msra.mxu0 0.0
        %931 = vmatprep.subr.mxu0 0.0
        %932 = vmatpush2.msra.mxu0 0.0
        %933 = vmatprep.subr.mxu0 0.0
        %934 = vmatpush2.msra.mxu0 0.0
        %935 = vmatprep.subr.mxu0 0.0
        %936 = vmatpush2.msra.mxu0 0.0
        %937 = vmatprep.subr.mxu0 0.0
        %938 = vmatpush2.msra.mxu0 0.0
        %939 = vmatprep.subr.mxu0 0.0
        %940 = vmatpush2.msra.mxu0 0.0
        %941 = vmatprep.subr.mxu0 0.0
        %942 = vmatpush2.msra.mxu0 0.0
        %943 = vmatprep.subr.mxu0 0.0
        %944 = vmatpush2.msra.mxu0 0.0
        %945 = vmatprep.subr.mxu0 0.0
        %946 = vmatpush2.msra.mxu0 0.0
        %947 = vmatprep.subr.mxu0 0.0
        %948 = vmatpush2.msra.mxu0 0.0
        %949 = vmatprep.subr.mxu0 0.0
        %950 = vmatpush2.msra.mxu0 0.0
        %951 = vmatprep.subr.mxu0 0.0
        %952 = vmatpush2.msra.mxu0 0.0
        %953 = vmatprep.subr.mxu0 0.0
        %954 = vmatpush2.msra.mxu0 0.0
        %955 = vmatprep.mubr.f32.mxu0 0.0
        %v956 = vand.u32 %v857, 4294901760
        %v957 = vsub.f32 %v857, %v956
        %v958 = vand.u32 %v957, 4294901760
        %v959 = vsub.f32 %v957, %v958
        %v960 = vand.u32 %v959, 4294901760
        %961 = vmatmul.mubr.f32.gmra.mxu0 %v960
        %v962 = vpop.f32.mrf.mxu0
        %v963 = vadd.f32 0.0, %v962
        %v964 = vpop.f32.mrf.mxu0
        %965 = vdwg.mxu0
        %966 = vmatprep.subr.mxu0 0.0
        %v967 = vand.u32 %v873, 4294901760
        %v968 = vsub.f32 %v873, %v967
        %v969 = vand.u32 %v968, 4294901760
        %v970 = vsub.f32 %v968, %v969
        %v971 = vand.u32 %v970, 4294901760
        %972 = vmatpush1.msra.mxu0 %v971
        %973 = vmatprep.subr.mxu0 0.0
        %v974 = vand.u32 %v872, 4294901760
        %v975 = vsub.f32 %v872, %v974
        %v976 = vand.u32 %v975, 4294901760
        %v977 = vsub.f32 %v975, %v976
        %v978 = vand.u32 %v977, 4294901760
        %979 = vmatpush1.msra.mxu0 %v978
        %980 = vmatprep.subr.mxu0 0.0
        %v981 = vand.u32 %v871, 4294901760
        %v982 = vsub.f32 %v871, %v981
        %v983 = vand.u32 %v982, 4294901760
        %v984 = vsub.f32 %v982, %v983
        %v985 = vand.u32 %v984, 4294901760
        %986 = vmatpush1.msra.mxu0 %v985
        %987 = vmatprep.subr.mxu0 0.0
        %v988 = vand.u32 %v870, 4294901760
        %v989 = vsub.f32 %v870, %v988
        %v990 = vand.u32 %v989, 4294901760
        %v991 = vsub.f32 %v989, %v990
        %v992 = vand.u32 %v991, 4294901760
        %993 = vmatpush1.msra.mxu0 %v992
        %994 = vmatprep.subr.mxu0 0.0
        %v995 = vand.u32 %v869, 4294901760
        %v996 = vsub.f32 %v869, %v995
        %v997 = vand.u32 %v996, 4294901760
        %v998 = vsub.f32 %v996, %v997
        %v999 = vand.u32 %v998, 4294901760
        %1000 = vmatpush1.msra.mxu0 %v999
        %1001 = vmatprep.subr.mxu0 0.0
        %v1002 = vand.u32 %v868, 4294901760
        %v1003 = vsub.f32 %v868, %v1002
        %v1004 = vand.u32 %v1003, 4294901760
        %v1005 = vsub.f32 %v1003, %v1004
        %v1006 = vand.u32 %v1005, 4294901760
        %1007 = vmatpush1.msra.mxu0 %v1006
        %1008 = vmatprep.subr.mxu0 0.0
        %v1009 = vand.u32 %v867, 4294901760
        %v1010 = vsub.f32 %v867, %v1009
        %v1011 = vand.u32 %v1010, 4294901760
        %v1012 = vsub.f32 %v1010, %v1011
        %v1013 = vand.u32 %v1012, 4294901760
        %1014 = vmatpush1.msra.mxu0 %v1013
        %1015 = vmatprep.subr.mxu0 0.0
        %v1016 = vand.u32 %v866, 4294901760
        %v1017 = vsub.f32 %v866, %v1016
        %v1018 = vand.u32 %v1017, 4294901760
        %v1019 = vsub.f32 %v1017, %v1018
        %v1020 = vand.u32 %v1019, 4294901760
        %1021 = vmatpush1.msra.mxu0 %v1020
        %1022 = vmatprep.subr.mxu0 0.0
        %v1023 = vand.u32 %v865, 4294901760
        %v1024 = vsub.f32 %v865, %v1023
        %v1025 = vand.u32 %v1024, 4294901760
        %v1026 = vsub.f32 %v1024, %v1025
        %v1027 = vand.u32 %v1026, 4294901760
        %1028 = vmatpush1.msra.mxu0 %v1027
        %1029 = vmatprep.subr.mxu0 0.0
        %v1030 = vand.u32 %v864, 4294901760
        %v1031 = vsub.f32 %v864, %v1030
        %v1032 = vand.u32 %v1031, 4294901760
        %v1033 = vsub.f32 %v1031, %v1032
        %v1034 = vand.u32 %v1033, 4294901760
        %1035 = vmatpush1.msra.mxu0 %v1034
        %1036 = vmatprep.subr.mxu0 0.0
        %v1037 = vand.u32 %v863, 4294901760
        %v1038 = vsub.f32 %v863, %v1037
        %v1039 = vand.u32 %v1038, 4294901760
        %v1040 = vsub.f32 %v1038, %v1039
        %v1041 = vand.u32 %v1040, 4294901760
        %1042 = vmatpush1.msra.mxu0 %v1041
        %1043 = vmatprep.subr.mxu0 0.0
        %v1044 = vand.u32 %v862, 4294901760
        %v1045 = vsub.f32 %v862, %v1044
        %v1046 = vand.u32 %v1045, 4294901760
        %v1047 = vsub.f32 %v1045, %v1046
        %v1048 = vand.u32 %v1047, 4294901760
        %1049 = vmatpush1.msra.mxu0 %v1048
        %1050 = vmatprep.subr.mxu0 0.0
        %v1051 = vand.u32 %v861, 4294901760
        %v1052 = vsub.f32 %v861, %v1051
        %v1053 = vand.u32 %v1052, 4294901760
        %v1054 = vsub.f32 %v1052, %v1053
        %v1055 = vand.u32 %v1054, 4294901760
        %1056 = vmatpush1.msra.mxu0 %v1055
        %1057 = vmatprep.subr.mxu0 0.0
        %v1058 = vand.u32 %v860, 4294901760
        %v1059 = vsub.f32 %v860, %v1058
        %v1060 = vand.u32 %v1059, 4294901760
        %v1061 = vsub.f32 %v1059, %v1060
        %v1062 = vand.u32 %v1061, 4294901760
        %1063 = vmatpush1.msra.mxu0 %v1062
        %1064 = vmatprep.subr.mxu0 0.0
        %v1065 = vand.u32 %v859, 4294901760
        %v1066 = vsub.f32 %v859, %v1065
        %v1067 = vand.u32 %v1066, 4294901760
        %v1068 = vsub.f32 %v1066, %v1067
        %v1069 = vand.u32 %v1068, 4294901760
        %1070 = vmatpush1.msra.mxu0 %v1069
        %1071 = vmatprep.subr.mxu0 0.0
        %v1072 = vand.u32 %v858, 4294901760
        %v1073 = vsub.f32 %v858, %v1072
        %v1074 = vand.u32 %v1073, 4294901760
        %v1075 = vsub.f32 %v1073, %v1074
        %v1076 = vand.u32 %v1075, 4294901760
        %1077 = vmatpush1.msra.mxu0 %v1076
        %1078 = vmatprep.subr.mxu0 0.0
        %1079 = vmatpush2.msra.mxu0 0.0
        %1080 = vmatprep.subr.mxu0 0.0
        %1081 = vmatpush2.msra.mxu0 0.0
        %1082 = vmatprep.subr.mxu0 0.0
        %1083 = vmatpush2.msra.mxu0 0.0
        %1084 = vmatprep.subr.mxu0 0.0
        %1085 = vmatpush2.msra.mxu0 0.0
        %1086 = vmatprep.subr.mxu0 0.0
        %1087 = vmatpush2.msra.mxu0 0.0
        %1088 = vmatprep.subr.mxu0 0.0
        %1089 = vmatpush2.msra.mxu0 0.0
        %1090 = vmatprep.subr.mxu0 0.0
        %1091 = vmatpush2.msra.mxu0 0.0
        %1092 = vmatprep.subr.mxu0 0.0
        %1093 = vmatpush2.msra.mxu0 0.0
        %1094 = vmatprep.subr.mxu0 0.0
        %1095 = vmatpush2.msra.mxu0 0.0
        %1096 = vmatprep.subr.mxu0 0.0
        %1097 = vmatpush2.msra.mxu0 0.0
        %1098 = vmatprep.subr.mxu0 0.0
        %1099 = vmatpush2.msra.mxu0 0.0
        %1100 = vmatprep.subr.mxu0 0.0
        %1101 = vmatpush2.msra.mxu0 0.0
        %1102 = vmatprep.subr.mxu0 0.0
        %1103 = vmatpush2.msra.mxu0 0.0
        %1104 = vmatprep.subr.mxu0 0.0
        %1105 = vmatpush2.msra.mxu0 0.0
        %1106 = vmatprep.subr.mxu0 0.0
        %1107 = vmatpush2.msra.mxu0 0.0
        %1108 = vmatprep.subr.mxu0 0.0
        %1109 = vmatpush2.msra.mxu0 0.0
        %1110 = vmatprep.mubr.f32.mxu0 0.0
        %v1111 = vand.u32 %v857, 4294901760
        %1112 = vmatmul.mubr.f32.gmra.mxu0 %v1111
        %v1113 = vpop.f32.mrf.mxu0
        %v1114 = vadd.f32 %v963, %v1113
        %v1115 = vpop.f32.mrf.mxu0
        %1116 = vdwg.mxu0
        %1117 = vmatprep.subr.mxu0 0.0
        %v1118 = vand.u32 %v873, 4294901760
        %v1119 = vsub.f32 %v873, %v1118
        %1120 = vmatpush1.msra.mxu0 %v1119
        %1121 = vmatprep.subr.mxu0 0.0
        %v1122 = vand.u32 %v872, 4294901760
        %v1123 = vsub.f32 %v872, %v1122
        %1124 = vmatpush1.msra.mxu0 %v1123
        %1125 = vmatprep.subr.mxu0 0.0
        %v1126 = vand.u32 %v871, 4294901760
        %v1127 = vsub.f32 %v871, %v1126
        %1128 = vmatpush1.msra.mxu0 %v1127
        %1129 = vmatprep.subr.mxu0 0.0
        %v1130 = vand.u32 %v870, 4294901760
        %v1131 = vsub.f32 %v870, %v1130
        %1132 = vmatpush1.msra.mxu0 %v1131
        %1133 = vmatprep.subr.mxu0 0.0
        %v1134 = vand.u32 %v869, 4294901760
        %v1135 = vsub.f32 %v869, %v1134
        %1136 = vmatpush1.msra.mxu0 %v1135
        %1137 = vmatprep.subr.mxu0 0.0
        %v1138 = vand.u32 %v868, 4294901760
        %v1139 = vsub.f32 %v868, %v1138
        %1140 = vmatpush1.msra.mxu0 %v1139
        %1141 = vmatprep.subr.mxu0 0.0
        %v1142 = vand.u32 %v867, 4294901760
        %v1143 = vsub.f32 %v867, %v1142
        %1144 = vmatpush1.msra.mxu0 %v1143
        %1145 = vmatprep.subr.mxu0 0.0
        %v1146 = vand.u32 %v866, 4294901760
        %v1147 = vsub.f32 %v866, %v1146
        %1148 = vmatpush1.msra.mxu0 %v1147
        %1149 = vmatprep.subr.mxu0 0.0
        %v1150 = vand.u32 %v865, 4294901760
        %v1151 = vsub.f32 %v865, %v1150
        %1152 = vmatpush1.msra.mxu0 %v1151
        %1153 = vmatprep.subr.mxu0 0.0
        %v1154 = vand.u32 %v864, 4294901760
        %v1155 = vsub.f32 %v864, %v1154
        %1156 = vmatpush1.msra.mxu0 %v1155
        %1157 = vmatprep.subr.mxu0 0.0
        %v1158 = vand.u32 %v863, 4294901760
        %v1159 = vsub.f32 %v863, %v1158
        %1160 = vmatpush1.msra.mxu0 %v1159
        %1161 = vmatprep.subr.mxu0 0.0
        %v1162 = vand.u32 %v862, 4294901760
        %v1163 = vsub.f32 %v862, %v1162
        %1164 = vmatpush1.msra.mxu0 %v1163
        %1165 = vmatprep.subr.mxu0 0.0
        %v1166 = vand.u32 %v861, 4294901760
        %v1167 = vsub.f32 %v861, %v1166
        %1168 = vmatpush1.msra.mxu0 %v1167
        %1169 = vmatprep.subr.mxu0 0.0
        %v1170 = vand.u32 %v860, 4294901760
        %v1171 = vsub.f32 %v860, %v1170
        %1172 = vmatpush1.msra.mxu0 %v1171
        %1173 = vmatprep.subr.mxu0 0.0
        %v1174 = vand.u32 %v859, 4294901760
        %v1175 = vsub.f32 %v859, %v1174
        %1176 = vmatpush1.msra.mxu0 %v1175
        %1177 = vmatprep.subr.mxu0 0.0
        %v1178 = vand.u32 %v858, 4294901760
        %v1179 = vsub.f32 %v858, %v1178
        %1180 = vmatpush1.msra.mxu0 %v1179
        %1181 = vmatprep.subr.mxu0 0.0
        %1182 = vmatpush2.msra.mxu0 0.0
        %1183 = vmatprep.subr.mxu0 0.0
        %1184 = vmatpush2.msra.mxu0 0.0
        %1185 = vmatprep.subr.mxu0 0.0
        %1186 = vmatpush2.msra.mxu0 0.0
        %1187 = vmatprep.subr.mxu0 0.0
        %1188 = vmatpush2.msra.mxu0 0.0
        %1189 = vmatprep.subr.mxu0 0.0
        %1190 = vmatpush2.msra.mxu0 0.0
        %1191 = vmatprep.subr.mxu0 0.0
        %1192 = vmatpush2.msra.mxu0 0.0
        %1193 = vmatprep.subr.mxu0 0.0
        %1194 = vmatpush2.msra.mxu0 0.0
        %1195 = vmatprep.subr.mxu0 0.0
        %1196 = vmatpush2.msra.mxu0 0.0
        %1197 = vmatprep.subr.mxu0 0.0
        %1198 = vmatpush2.msra.mxu0 0.0
        %1199 = vmatprep.subr.mxu0 0.0
        %1200 = vmatpush2.msra.mxu0 0.0
        %1201 = vmatprep.subr.mxu0 0.0
        %1202 = vmatpush2.msra.mxu0 0.0
        %1203 = vmatprep.subr.mxu0 0.0
        %1204 = vmatpush2.msra.mxu0 0.0
        %1205 = vmatprep.subr.mxu0 0.0
        %1206 = vmatpush2.msra.mxu0 0.0
        %1207 = vmatprep.subr.mxu0 0.0
        %1208 = vmatpush2.msra.mxu0 0.0
        %1209 = vmatprep.subr.mxu0 0.0
        %1210 = vmatpush2.msra.mxu0 0.0
        %1211 = vmatprep.subr.mxu0 0.0
        %1212 = vmatpush2.msra.mxu0 0.0
        %1213 = vmatprep.mubr.f32.mxu0 0.0
        %v1214 = vand.u32 %v857, 4294901760
        %v1215 = vsub.f32 %v857, %v1214
        %1216 = vmatmul.mubr.f32.gmra.mxu0 %v1215
        %v1217 = vpop.f32.mrf.mxu0
        %v1218 = vadd.f32 %v1114, %v1217
        %v1219 = vpop.f32.mrf.mxu0
        %1220 = vdwg.mxu0
        %1221 = vmatprep.subr.mxu0 0.0
        %v1222 = vand.u32 %v873, 4294901760
        %1223 = vmatpush1.msra.mxu0 %v1222
        %1224 = vmatprep.subr.mxu0 0.0
        %v1225 = vand.u32 %v872, 4294901760
        %1226 = vmatpush1.msra.mxu0 %v1225
        %1227 = vmatprep.subr.mxu0 0.0
        %v1228 = vand.u32 %v871, 4294901760
        %1229 = vmatpush1.msra.mxu0 %v1228
        %1230 = vmatprep.subr.mxu0 0.0
        %v1231 = vand.u32 %v870, 4294901760
        %1232 = vmatpush1.msra.mxu0 %v1231
        %1233 = vmatprep.subr.mxu0 0.0
        %v1234 = vand.u32 %v869, 4294901760
        %1235 = vmatpush1.msra.mxu0 %v1234
        %1236 = vmatprep.subr.mxu0 0.0
        %v1237 = vand.u32 %v868, 4294901760
        %1238 = vmatpush1.msra.mxu0 %v1237
        %1239 = vmatprep.subr.mxu0 0.0
        %v1240 = vand.u32 %v867, 4294901760
        %1241 = vmatpush1.msra.mxu0 %v1240
        %1242 = vmatprep.subr.mxu0 0.0
        %v1243 = vand.u32 %v866, 4294901760
        %1244 = vmatpush1.msra.mxu0 %v1243
        %1245 = vmatprep.subr.mxu0 0.0
        %v1246 = vand.u32 %v865, 4294901760
        %1247 = vmatpush1.msra.mxu0 %v1246
        %1248 = vmatprep.subr.mxu0 0.0
        %v1249 = vand.u32 %v864, 4294901760
        %1250 = vmatpush1.msra.mxu0 %v1249
        %1251 = vmatprep.subr.mxu0 0.0
        %v1252 = vand.u32 %v863, 4294901760
        %1253 = vmatpush1.msra.mxu0 %v1252
        %1254 = vmatprep.subr.mxu0 0.0
        %v1255 = vand.u32 %v862, 4294901760
        %1256 = vmatpush1.msra.mxu0 %v1255
        %1257 = vmatprep.subr.mxu0 0.0
        %v1258 = vand.u32 %v861, 4294901760
        %1259 = vmatpush1.msra.mxu0 %v1258
        %1260 = vmatprep.subr.mxu0 0.0
        %v1261 = vand.u32 %v860, 4294901760
        %1262 = vmatpush1.msra.mxu0 %v1261
        %1263 = vmatprep.subr.mxu0 0.0
        %v1264 = vand.u32 %v859, 4294901760
        %1265 = vmatpush1.msra.mxu0 %v1264
        %1266 = vmatprep.subr.mxu0 0.0
        %v1267 = vand.u32 %v858, 4294901760
        %1268 = vmatpush1.msra.mxu0 %v1267
        %1269 = vmatprep.subr.mxu0 0.0
        %1270 = vmatpush2.msra.mxu0 0.0
        %1271 = vmatprep.subr.mxu0 0.0
        %1272 = vmatpush2.msra.mxu0 0.0
        %1273 = vmatprep.subr.mxu0 0.0
        %1274 = vmatpush2.msra.mxu0 0.0
        %1275 = vmatprep.subr.mxu0 0.0
        %1276 = vmatpush2.msra.mxu0 0.0
        %1277 = vmatprep.subr.mxu0 0.0
        %1278 = vmatpush2.msra.mxu0 0.0
        %1279 = vmatprep.subr.mxu0 0.0
        %1280 = vmatpush2.msra.mxu0 0.0
        %1281 = vmatprep.subr.mxu0 0.0
        %1282 = vmatpush2.msra.mxu0 0.0
        %1283 = vmatprep.subr.mxu0 0.0
        %1284 = vmatpush2.msra.mxu0 0.0
        %1285 = vmatprep.subr.mxu0 0.0
        %1286 = vmatpush2.msra.mxu0 0.0
        %1287 = vmatprep.subr.mxu0 0.0
        %1288 = vmatpush2.msra.mxu0 0.0
        %1289 = vmatprep.subr.mxu0 0.0
        %1290 = vmatpush2.msra.mxu0 0.0
        %1291 = vmatprep.subr.mxu0 0.0
        %1292 = vmatpush2.msra.mxu0 0.0
        %1293 = vmatprep.subr.mxu0 0.0
        %1294 = vmatpush2.msra.mxu0 0.0
        %1295 = vmatprep.subr.mxu0 0.0
        %1296 = vmatpush2.msra.mxu0 0.0
        %1297 = vmatprep.subr.mxu0 0.0
        %1298 = vmatpush2.msra.mxu0 0.0
        %1299 = vmatprep.subr.mxu0 0.0
        %1300 = vmatpush2.msra.mxu0 0.0
        %1301 = vmatprep.mubr.f32.mxu0 0.0
        %v1302 = vand.u32 %v857, 4294901760
        %v1303 = vsub.f32 %v857, %v1302
        %v1304 = vand.u32 %v1303, 4294901760
        %1305 = vmatmul.mubr.f32.gmra.mxu0 %v1304
        %v1306 = vpop.f32.mrf.mxu0
        %v1307 = vadd.f32 %v1218, %v1306
        %v1308 = vpop.f32.mrf.mxu0
        %1309 = vdwg.mxu0
        %1310 = vmatprep.subr.mxu0 0.0
        %v1311 = vand.u32 %v873, 4294901760
        %v1312 = vsub.f32 %v873, %v1311
        %v1313 = vand.u32 %v1312, 4294901760
        %1314 = vmatpush1.msra.mxu0 %v1313
        %1315 = vmatprep.subr.mxu0 0.0
        %v1316 = vand.u32 %v872, 4294901760
        %v1317 = vsub.f32 %v872, %v1316
        %v1318 = vand.u32 %v1317, 4294901760
        %1319 = vmatpush1.msra.mxu0 %v1318
        %1320 = vmatprep.subr.mxu0 0.0
        %v1321 = vand.u32 %v871, 4294901760
        %v1322 = vsub.f32 %v871, %v1321
        %v1323 = vand.u32 %v1322, 4294901760
        %1324 = vmatpush1.msra.mxu0 %v1323
        %1325 = vmatprep.subr.mxu0 0.0
        %v1326 = vand.u32 %v870, 4294901760
        %v1327 = vsub.f32 %v870, %v1326
        %v1328 = vand.u32 %v1327, 4294901760
        %1329 = vmatpush1.msra.mxu0 %v1328
        %1330 = vmatprep.subr.mxu0 0.0
        %v1331 = vand.u32 %v869, 4294901760
        %v1332 = vsub.f32 %v869, %v1331
        %v1333 = vand.u32 %v1332, 4294901760
        %1334 = vmatpush1.msra.mxu0 %v1333
        %1335 = vmatprep.subr.mxu0 0.0
        %v1336 = vand.u32 %v868, 4294901760
        %v1337 = vsub.f32 %v868, %v1336
        %v1338 = vand.u32 %v1337, 4294901760
        %1339 = vmatpush1.msra.mxu0 %v1338
        %1340 = vmatprep.subr.mxu0 0.0
        %v1341 = vand.u32 %v867, 4294901760
        %v1342 = vsub.f32 %v867, %v1341
        %v1343 = vand.u32 %v1342, 4294901760
        %1344 = vmatpush1.msra.mxu0 %v1343
        %1345 = vmatprep.subr.mxu0 0.0
        %v1346 = vand.u32 %v866, 4294901760
        %v1347 = vsub.f32 %v866, %v1346
        %v1348 = vand.u32 %v1347, 4294901760
        %1349 = vmatpush1.msra.mxu0 %v1348
        %1350 = vmatprep.subr.mxu0 0.0
        %v1351 = vand.u32 %v865, 4294901760
        %v1352 = vsub.f32 %v865, %v1351
        %v1353 = vand.u32 %v1352, 4294901760
        %1354 = vmatpush1.msra.mxu0 %v1353
        %1355 = vmatprep.subr.mxu0 0.0
        %v1356 = vand.u32 %v864, 4294901760
        %v1357 = vsub.f32 %v864, %v1356
        %v1358 = vand.u32 %v1357, 4294901760
        %1359 = vmatpush1.msra.mxu0 %v1358
        %1360 = vmatprep.subr.mxu0 0.0
        %v1361 = vand.u32 %v863, 4294901760
        %v1362 = vsub.f32 %v863, %v1361
        %v1363 = vand.u32 %v1362, 4294901760
        %1364 = vmatpush1.msra.mxu0 %v1363
        %1365 = vmatprep.subr.mxu0 0.0
        %v1366 = vand.u32 %v862, 4294901760
        %v1367 = vsub.f32 %v862, %v1366
        %v1368 = vand.u32 %v1367, 4294901760
        %1369 = vmatpush1.msra.mxu0 %v1368
        %1370 = vmatprep.subr.mxu0 0.0
        %v1371 = vand.u32 %v861, 4294901760
        %v1372 = vsub.f32 %v861, %v1371
        %v1373 = vand.u32 %v1372, 4294901760
        %1374 = vmatpush1.msra.mxu0 %v1373
        %1375 = vmatprep.subr.mxu0 0.0
        %v1376 = vand.u32 %v860, 4294901760
        %v1377 = vsub.f32 %v860, %v1376
        %v1378 = vand.u32 %v1377, 4294901760
        %1379 = vmatpush1.msra.mxu0 %v1378
        %1380 = vmatprep.subr.mxu0 0.0
        %v1381 = vand.u32 %v859, 4294901760
        %v1382 = vsub.f32 %v859, %v1381
        %v1383 = vand.u32 %v1382, 4294901760
        %1384 = vmatpush1.msra.mxu0 %v1383
        %1385 = vmatprep.subr.mxu0 0.0
        %v1386 = vand.u32 %v858, 4294901760
        %v1387 = vsub.f32 %v858, %v1386
        %v1388 = vand.u32 %v1387, 4294901760
        %1389 = vmatpush1.msra.mxu0 %v1388
        %1390 = vmatprep.subr.mxu0 0.0
        %1391 = vmatpush2.msra.mxu0 0.0
        %1392 = vmatprep.subr.mxu0 0.0
        %1393 = vmatpush2.msra.mxu0 0.0
        %1394 = vmatprep.subr.mxu0 0.0
        %1395 = vmatpush2.msra.mxu0 0.0
        %1396 = vmatprep.subr.mxu0 0.0
        %1397 = vmatpush2.msra.mxu0 0.0
        %1398 = vmatprep.subr.mxu0 0.0
        %1399 = vmatpush2.msra.mxu0 0.0
        %1400 = vmatprep.subr.mxu0 0.0
        %1401 = vmatpush2.msra.mxu0 0.0
        %1402 = vmatprep.subr.mxu0 0.0
        %1403 = vmatpush2.msra.mxu0 0.0
        %1404 = vmatprep.subr.mxu0 0.0
        %1405 = vmatpush2.msra.mxu0 0.0
        %1406 = vmatprep.subr.mxu0 0.0
        %1407 = vmatpush2.msra.mxu0 0.0
        %1408 = vmatprep.subr.mxu0 0.0
        %1409 = vmatpush2.msra.mxu0 0.0
        %1410 = vmatprep.subr.mxu0 0.0
        %1411 = vmatpush2.msra.mxu0 0.0
        %1412 = vmatprep.subr.mxu0 0.0
        %1413 = vmatpush2.msra.mxu0 0.0
        %1414 = vmatprep.subr.mxu0 0.0
        %1415 = vmatpush2.msra.mxu0 0.0
        %1416 = vmatprep.subr.mxu0 0.0
        %1417 = vmatpush2.msra.mxu0 0.0
        %1418 = vmatprep.subr.mxu0 0.0
        %1419 = vmatpush2.msra.mxu0 0.0
        %1420 = vmatprep.subr.mxu0 0.0
        %1421 = vmatpush2.msra.mxu0 0.0
        %1422 = vmatprep.mubr.f32.mxu0 0.0
        %v1423 = vand.u32 %v857, 4294901760
        %1424 = vmatmul.mubr.f32.gmra.mxu0 %v1423
        %v1425 = vpop.f32.mrf.mxu0
        %v1426 = vadd.f32 %v1307, %v1425
        %v1427 = vpop.f32.mrf.mxu0
        %1428 = vdwg.mxu0
        %1429 = vmatprep.subr.mxu0 0.0
        %v1430 = vand.u32 %v873, 4294901760
        %1431 = vmatpush1.msra.mxu0 %v1430
        %1432 = vmatprep.subr.mxu0 0.0
        %v1433 = vand.u32 %v872, 4294901760
        %1434 = vmatpush1.msra.mxu0 %v1433
        %1435 = vmatprep.subr.mxu0 0.0
        %v1436 = vand.u32 %v871, 4294901760
        %1437 = vmatpush1.msra.mxu0 %v1436
        %1438 = vmatprep.subr.mxu0 0.0
        %v1439 = vand.u32 %v870, 4294901760
        %1440 = vmatpush1.msra.mxu0 %v1439
        %1441 = vmatprep.subr.mxu0 0.0
        %v1442 = vand.u32 %v869, 4294901760
        %1443 = vmatpush1.msra.mxu0 %v1442
        %1444 = vmatprep.subr.mxu0 0.0
        %v1445 = vand.u32 %v868, 4294901760
        %1446 = vmatpush1.msra.mxu0 %v1445
        %1447 = vmatprep.subr.mxu0 0.0
        %v1448 = vand.u32 %v867, 4294901760
        %1449 = vmatpush1.msra.mxu0 %v1448
        %1450 = vmatprep.subr.mxu0 0.0
        %v1451 = vand.u32 %v866, 4294901760
        %1452 = vmatpush1.msra.mxu0 %v1451
        %1453 = vmatprep.subr.mxu0 0.0
        %v1454 = vand.u32 %v865, 4294901760
        %1455 = vmatpush1.msra.mxu0 %v1454
        %1456 = vmatprep.subr.mxu0 0.0
        %v1457 = vand.u32 %v864, 4294901760
        %1458 = vmatpush1.msra.mxu0 %v1457
        %1459 = vmatprep.subr.mxu0 0.0
        %v1460 = vand.u32 %v863, 4294901760
        %1461 = vmatpush1.msra.mxu0 %v1460
        %1462 = vmatprep.subr.mxu0 0.0
        %v1463 = vand.u32 %v862, 4294901760
        %1464 = vmatpush1.msra.mxu0 %v1463
        %1465 = vmatprep.subr.mxu0 0.0
        %v1466 = vand.u32 %v861, 4294901760
        %1467 = vmatpush1.msra.mxu0 %v1466
        %1468 = vmatprep.subr.mxu0 0.0
        %v1469 = vand.u32 %v860, 4294901760
        %1470 = vmatpush1.msra.mxu0 %v1469
        %1471 = vmatprep.subr.mxu0 0.0
        %v1472 = vand.u32 %v859, 4294901760
        %1473 = vmatpush1.msra.mxu0 %v1472
        %1474 = vmatprep.subr.mxu0 0.0
        %v1475 = vand.u32 %v858, 4294901760
        %1476 = vmatpush1.msra.mxu0 %v1475
        %1477 = vmatprep.subr.mxu0 0.0
        %1478 = vmatpush2.msra.mxu0 0.0
        %1479 = vmatprep.subr.mxu0 0.0
        %1480 = vmatpush2.msra.mxu0 0.0
        %1481 = vmatprep.subr.mxu0 0.0
        %1482 = vmatpush2.msra.mxu0 0.0
        %1483 = vmatprep.subr.mxu0 0.0
        %1484 = vmatpush2.msra.mxu0 0.0
        %1485 = vmatprep.subr.mxu0 0.0
        %1486 = vmatpush2.msra.mxu0 0.0
        %1487 = vmatprep.subr.mxu0 0.0
        %1488 = vmatpush2.msra.mxu0 0.0
        %1489 = vmatprep.subr.mxu0 0.0
        %1490 = vmatpush2.msra.mxu0 0.0
        %1491 = vmatprep.subr.mxu0 0.0
        %1492 = vmatpush2.msra.mxu0 0.0
        %1493 = vmatprep.subr.mxu0 0.0
        %1494 = vmatpush2.msra.mxu0 0.0
        %1495 = vmatprep.subr.mxu0 0.0
        %1496 = vmatpush2.msra.mxu0 0.0
        %1497 = vmatprep.subr.mxu0 0.0
        %1498 = vmatpush2.msra.mxu0 0.0
        %1499 = vmatprep.subr.mxu0 0.0
        %1500 = vmatpush2.msra.mxu0 0.0
        %1501 = vmatprep.subr.mxu0 0.0
        %1502 = vmatpush2.msra.mxu0 0.0
        %1503 = vmatprep.subr.mxu0 0.0
        %1504 = vmatpush2.msra.mxu0 0.0
        %1505 = vmatprep.subr.mxu0 0.0
        %1506 = vmatpush2.msra.mxu0 0.0
        %1507 = vmatprep.subr.mxu0 0.0
        %1508 = vmatpush2.msra.mxu0 0.0
        %1509 = vmatprep.mubr.f32.mxu0 0.0
        %v1510 = vand.u32 %v857, 4294901760
        %1511 = vmatmul.mubr.f32.gmra.mxu0 %v1510
        %v1512 = vpop.f32.mrf.mxu0
        %v1513 = vadd.f32 %v1426, %v1512
        %v1514 = vpop.f32.mrf.mxu0
        %1515 = vdwg.mxu0
        %v1516 = vlaneseq
        %v1517 = vshrl.u32 %v1516, 7
        %v1518 = vsub.s32 0, %v1517
        %v1519 = vrot.slane %v874, %v1518
        %v1520 = vadd.f32 %v1513, %v1519
        %vm1521 = vcmask 64512
        %1522 = vst.msk [vmem:[%s153] sm:$0xff] %vm1521, %v1520
        %p1523 = scmp.lt.s32.totalorder %s14, 1
        %s1524 = scalar_select %p1523, %s14, 1
        %s1525 = smul.addr %s1524, 8
        %s1526 = scalar_lea.vmem %s2, %s1525
        // Predicated region
        $region33: #{tpu_custom_call.1} parent=27 // pred_check
          %p1527 = pneg %p79
        $region34: #{tpu_custom_call.1} parent=27 // pred_check_branch
          %1529 = sbr.rel (%p1527) target = $region36
        $region35: #{tpu_custom_call.1} parent=27 // pred_region
          _
        $region36: #{tpu_custom_call.1} parent=27 // pred_fallthru
          _
      $region28: #{tpu_custom_call.1} parent=5 // pred_fallthru
        _
      %p1530 = scmp.le.s32.totalorder 2, %s9
      // Predicated region
      $region37: #{tpu_custom_call.1} parent=5 // pred_check
        %p1531 = pneg %p1530
      $region38: #{tpu_custom_call.1} parent=5 // pred_check_branch
        %1533 = sbr.rel (%p1531) target = $region40
      $region39: #{tpu_custom_call.1} parent=5 // pred_region
        %s1534 = ssub.s32 %s9, 2
        // Predicated region
        $region41: #{tpu_custom_call.1} parent=39 // pred_check
          %p1535 = pneg %p85
        $region42: #{tpu_custom_call.1} parent=39 // pred_check_branch
          %1537 = sbr.rel (%p1535) target = $region44
        $region43: #{tpu_custom_call.1} parent=39 // pred_region
          %p1538 = scmp.lt.s32.totalorder %s15, 1
          %s1539 = scalar_select %p1538, %s15, 1
          %s1540 = smul.addr %s1539, 8
          %s1541 = scalar_lea.vmem %s2, %s1540
        $region44: #{tpu_custom_call.1} parent=39 // pred_fallthru
          _
      $region40: #{tpu_custom_call.1} parent=5 // pred_fallthru
        _
    $region6: #{tpu_custom_call.1} parent=1 // loop_footer
      %s13 = sadd.s32 1, %s9
    $region7: #{tpu_custom_call.1} parent=1 // loop_footer_branch
      %8 = sbr.rel target = $region3
    $region8: #{tpu_custom_call.1} parent=1 // loop_exit
      _
    %1542 = vsyncpa [#allocation3], 1
    %s1543 = scalar_lea.sflag [#allocation3], 1
    %1544 = vsyncpa %s1543, 1

</llo_original>
